<compile_context>
chip_gen: v6e
topology: v6e:2x2x1
jax: 0.10.0
libtpu: 0.0.40
codegen_flags: <defaults>
</compile_context>

<pallas_src>
import jax
import jax.numpy as jnp
from jax.experimental import pallas as pl
from jax.experimental.pallas import tpu as pltpu


def _round_up(x, m):
    return (x + m - 1) // m * m


def tts_kernel(x_ref, w1_ref, c1_ref, w2_ref, c2_ref, w3_ref, c3_ref,
               phis_ref, y_ref, bias_ref, ar_ref, out_ref, h_sc, carry_sc):
    j = pl.program_id(1)
    tn = out_ref.shape[1]

    # ---- Encoder MLP (BatchNorm folded, Dropout = identity); once per D tile ----
    @pl.when(j == 0)
    def _():
        h = jnp.maximum(
            jnp.dot(x_ref[...], w1_ref[...], preferred_element_type=jnp.float32)
            + c1_ref[...], 0.0)
        h = jnp.maximum(
            jnp.dot(h, w2_ref[...], preferred_element_type=jnp.float32) + c2_ref[...], 0.0)
        h_sc[...] = jnp.dot(h, w3_ref[...], preferred_element_type=jnp.float32) + c3_ref[...]
        carry_sc[...] = jnp.zeros_like(carry_sc)     # resid before t = 0 is 0

    h = h_sc[...]                                    # (td, B) latent coefficients

    # ---- preds[d, n] = sum_b Phis[b, d, n] * h[d, b] + bias  (lane axis = time) ----
    preds = jnp.full(out_ref.shape, bias_ref[0, 0], dtype=jnp.float32)
    for b in range(phis_ref.shape[0]):               # small static B, fully unrolled
        preds = preds + phis_ref[b].astype(jnp.float32) * h[:, b:b + 1]

    # ---- AR(1): out = preds + expit_m1(phi) * resid shifted by one time step ----
    resid = y_ref[...].astype(jnp.float32) - preds
    if tn % 128 == 0:
        # 128-aligned time tile: lane rotate (XLU), as in the previous proven version.
        shifted = pltpu.roll(resid, shift=1, axis=1)
    else:
        # Small / unaligned time extent: exact shift via a tiny 0/1 matrix on the MXU.
        r = jax.lax.broadcasted_iota(jnp.int32, (tn, tn), 0)
        c = jax.lax.broadcasted_iota(jnp.int32, (tn, tn), 1)
        smat = (r + 1 == c).astype(jnp.float32)      # smat[n-1, n] = 1, column 0 = 0
        shifted = jnp.dot(resid, smat, preferred_element_type=jnp.float32,
                          precision=jax.lax.Precision.HIGHEST)

    col = jax.lax.broadcasted_iota(jnp.int32, resid.shape, 1)
    shifted = jnp.where(col == 0, carry_sc[...], shifted)   # carry resid across N tiles
    carry_sc[...] = resid[:, -1:]                            # carry into the next N tile
    out_ref[...] = preds + ar_ref[0, 0] * shifted


def tts_forward(X, Phis_bdn, y, params, *, td=None, tn=None):
    """TTS forward (tensor dataloader, AR(1), static bias).

    Args:
      X:        (D, M) static features.
      Phis_bdn: (B, D, N) basis matrix stored time-minor (lane-dense) upstream; bf16 or f32.
                This is the same data as the module's (D, N, B) Phis, just stored
                transposed so the kernel streams it without any wrapper-side re-layout.
      y:        (D, N) observations.
      params:   encoder weights (BN as scale/shift) + scalar bias and AR phi.
    Returns:
      (D, N) float32 predictions (preds + AR(1) correction), matching TTS.forward.
    """
    D, M = X.shape
    B, D2, N = Phis_bdn.shape
    assert D2 == D and y.shape == (D, N)
    H1 = params["w1"].shape[1]
    H2 = params["w2"].shape[1]
    f32 = jnp.float32

    # ---- Time tiling: keep HBM unpadded; tile only long series (carry handles AR(1)). ----
    if tn is None:
        if N <= 256:
            tn = N                                            # single time tile
        else:
            tn = _round_up(pl.cdiv(N, pl.cdiv(N, 1024)), 128)  # 128-aligned tiles
    n_steps = pl.cdiv(N, tn)
    tn_vmem = _round_up(tn, 128)                              # lane padding exists only in VMEM
    m_vmem = _round_up(M, 128)
    phis_isz = jnp.dtype(Phis_bdn.dtype).itemsize
    y_isz = jnp.dtype(y.dtype).itemsize

    def blk_bytes(t):
        # double-buffered streams + (double-buffered) resident weights + scratch
        streams = 2 * (B * t * tn_vmem * phis_isz             # Phis tile
                       + t * tn_vmem * y_isz                  # y tile
                       + t * tn_vmem * 4                      # out tile
                       + t * m_vmem * 4)                      # X tile
        weights = 2 * 4 * (M * H1 + H1 + H1 * H2 + H2 + H2 * B + B)
        scratch = 4 * t * (_round_up(B, 128) + 128)           # h / carry scratch
        return streams + weights + scratch

    # ---- VMEM budget / D tiling, sized per chip generation. ----
    try:
        vmem_cap = pltpu.get_tpu_info().vmem_capacity_bytes   # 128 MiB v5e/v6e, 64 MiB v7x
    except Exception:
        vmem_cap = 64 << 20                                   # conservative fallback
    budget = int(vmem_cap * 0.65)

    if td is None:
        # Largest tile that fits, but keep >= 4 D steps when D allows so the "parallel"
        # axis actually splits across both TensorCores on v7x.
        td = min(1024, max(8, _round_up(pl.cdiv(D, 4), 8)))
    td = max(8, _round_up(td, 8))
    while td > 8 and blk_bytes(td) > budget:
        td = max(8, _round_up(td // 2, 8))
    d_steps = pl.cdiv(D, td)
    vmem_limit = int(min(vmem_cap * 0.85, 100 << 20))

    # ---- Fold eval-mode BatchNorm into the Linear layers (tiny, host side). ----
    w1 = (params["w1"] * params["s1"]).astype(f32)
    c1 = (params["b1"] * params["s1"] + params["t1"]).astype(f32)
    w2 = (params["w2"] * params["s2"]).astype(f32)
    c2 = (params["b2"] * params["s2"] + params["t2"]).astype(f32)
    w3 = params["w3"].astype(f32)
    c3 = params["b3"].astype(f32)
    bias = params["bias"].astype(f32)                               # (1, 1) scalar
    ar_coef = (2.0 * jax.nn.sigmoid(params["phi"]) - 1.0).astype(f32)  # expit_m1(phi), (1, 1)

    smem = pltpu.MemorySpace.SMEM
    out = pl.pallas_call(
        tts_kernel,
        out_shape=jax.ShapeDtypeStruct((D, N), f32),
        grid=(d_steps, n_steps),
        in_specs=[
            pl.BlockSpec((td, M), lambda i, j: (i, 0)),            # X tile
            pl.BlockSpec((M, H1), lambda i, j: (0, 0)),            # W1 (BN-folded), resident
            pl.BlockSpec((1, H1), lambda i, j: (0, 0)),            # c1
            pl.BlockSpec((H1, H2), lambda i, j: (0, 0)),           # W2
            pl.BlockSpec((1, H2), lambda i, j: (0, 0)),            # c2
            pl.BlockSpec((H2, B), lambda i, j: (0, 0)),            # W3
            pl.BlockSpec((1, B), lambda i, j: (0, 0)),             # c3
            pl.BlockSpec((B, td, tn), lambda i, j: (0, i, j)),     # Phis (B, D, N), bf16
            pl.BlockSpec((td, tn), lambda i, j: (i, j)),           # y tile
            pl.BlockSpec(memory_space=smem),                       # bias scalar
            pl.BlockSpec(memory_space=smem),                       # AR coefficient scalar
        ],
        out_specs=pl.BlockSpec((td, tn), lambda i, j: (i, j)),
        scratch_shapes=[pltpu.VMEM((td, B), f32),                  # latent h (per D tile)
                        pltpu.VMEM((td, 1), f32)],                 # AR residual carry
        compiler_params=pltpu.CompilerParams(
            dimension_semantics=("parallel", "arbitrary"),
            vmem_limit_bytes=vmem_limit),
    )(X.astype(f32), w1, c1, w2, c2, w3, c3, Phis_bdn, y, bias, ar_coef)
    return out


def tts_reference(X, Phis_dnb, y, params):
    """Pure-JAX reference mirroring the PyTorch forward (eval-mode BN, AR(1))."""
    h = X @ params["w1"] + params["b1"]
    h = jnp.maximum(h * params["s1"] + params["t1"], 0.0)
    h = h @ params["w2"] + params["b2"]
    h = jnp.maximum(h * params["s2"] + params["t2"], 0.0)
    h = h @ params["w3"] + params["b3"]
    preds = jnp.einsum("dnb,db->dn", Phis_dnb, h) + params["bias"][0, 0]
    resid = y - preds
    shifted = jnp.concatenate(
        [jnp.zeros((resid.shape[0], 1), resid.dtype), resid[:, :-1]], axis=1)
    ar_coef = 2.0 * jax.nn.sigmoid(params["phi"][0, 0]) - 1.0
    return preds + ar_coef * shifted


def make_params(key, M, H1, H2, B):
    """Deterministic synthetic parameters (eval-mode BatchNorm as scale/shift)."""
    eps = 1e-5
    ks = jax.random.split(key, 12)
    f = jnp.float32

    w1 = (jax.random.normal(ks[0], (M, H1)) * 0.1).astype(f)
    b1 = (jax.random.normal(ks[1], (1, H1)) * 0.1).astype(f)
    w2 = (jax.random.normal(ks[2], (H1, H2)) * 0.1).astype(f)
    b2 = (jax.random.normal(ks[3], (1, H2)) * 0.1).astype(f)
    w3 = (jax.random.normal(ks[4], (H2, B)) * 0.1).astype(f)
    b3 = (jax.random.normal(ks[5], (1, B)) * 0.1).astype(f)

    g1 = 1.0 + 0.1 * jax.random.normal(ks[6], (1, H1))
    be1 = 0.1 * jax.random.normal(ks[7], (1, H1))
    mu1 = 0.05 * jax.random.normal(ks[8], (1, H1))
    var1 = 1.0 + 0.1 * jnp.abs(jax.random.normal(ks[9], (1, H1)))
    s1 = (g1 / jnp.sqrt(var1 + eps)).astype(f)
    t1 = (be1 - mu1 * g1 / jnp.sqrt(var1 + eps)).astype(f)

    g2 = 1.0 + 0.1 * jax.random.normal(ks[10], (1, H2))
    be2 = 0.1 * jax.random.normal(ks[11], (1, H2))
    mu2 = jnp.zeros((1, H2))
    var2 = jnp.ones((1, H2))
    s2 = (g2 / jnp.sqrt(var2 + eps)).astype(f)
    t2 = (be2 - mu2 * g2 / jnp.sqrt(var2 + eps)).astype(f)

    bias = jnp.full((1, 1), 0.25, dtype=f)   # global scalar bias parameter
    phi = jnp.full((1, 1), 0.5, dtype=f)     # AR(1) parameter

    return dict(w1=w1, b1=b1, s1=s1, t1=t1,
                w2=w2, b2=b2, s2=s2, t2=t2,
                w3=w3, b3=b3, bias=bias, phi=phi)


if __name__ == "__main__":
    # Small shapes: D samples, M static features, B basis functions, N time steps.
    D, M, B, N = 24, 4, 8, 16
    H1, H2 = 32, 32

    key = jax.random.PRNGKey(0)
    kX, kP, kY, kW = jax.random.split(key, 4)

    X = jax.random.normal(kX, (D, M), dtype=jnp.float32)
    # Phis is stored upstream in the kernel's (B, D, N) time-minor layout and in bf16,
    # so the wrapper does zero data movement on the dominant stream.
    Phis_bdn = jax.random.uniform(kP, (B, D, N), dtype=jnp.float32).astype(jnp.bfloat16)
    y = jax.random.normal(kY, (D, N), dtype=jnp.float32)
    params = make_params(kW, M, H1, H2, B)

    # td=8 -> 3 D tiles, exercising the tiled / pipelined ("parallel") path.
    out = tts_forward(X, Phis_bdn, y, params, td=8)
    out = jax.block_until_ready(out)

    # Reference consumes the same (bf16-quantized) basis values in the module's (D, N, B) layout.
    Phis_dnb = jnp.transpose(Phis_bdn.astype(jnp.float32), (1, 2, 0))
    ref = tts_reference(X, Phis_dnb, y, params)
    assert out.shape == (D, N)
    assert jnp.allclose(out, ref, atol=1e-4, rtol=1e-4), "mismatch vs reference"

    # TODO(synk): 'iterative' dataloader path (Python list of ragged Phi tensors), the
    # dynamic_bias branch, the 'neural' AR option, and train-mode BatchNorm/Dropout are not
    # expressed in the kernel (eval-mode tensor-dataloader inference assumed).
    print("KERNEL_OK")
</pallas_src>

<mosaic_0001>
module attributes {stable_mosaic.version = 11 : i64} {
  func.func @tts_kernel(%arg0: i32, %arg1: i32, %arg2: memref<8x4xf32, #tpu.memory_space<vmem>>, %arg3: memref<4x32xf32, #tpu.memory_space<vmem>>, %arg4: memref<1x32xf32, #tpu.memory_space<vmem>>, %arg5: memref<32x32xf32, #tpu.memory_space<vmem>>, %arg6: memref<1x32xf32, #tpu.memory_space<vmem>>, %arg7: memref<32x8xf32, #tpu.memory_space<vmem>>, %arg8: memref<1x8xf32, #tpu.memory_space<vmem>>, %arg9: memref<8x8x16xbf16, #tpu.memory_space<vmem>>, %arg10: memref<8x16xf32, #tpu.memory_space<vmem>>, %arg11: memref<1x1xf32, #tpu.memory_space<smem>>, %arg12: memref<1x1xf32, #tpu.memory_space<smem>>, %arg13: memref<8x16xf32, #tpu.memory_space<vmem>>, %arg14: memref<8x8xf32, #tpu.memory_space<vmem>>, %arg15: memref<8x1xf32, #tpu.memory_space<vmem>>) attributes {dimension_semantics = [#tpu.dimension_semantics<parallel>, #tpu.dimension_semantics<arbitrary>], iteration_bounds = array<i64: 3, 1>, scalar_prefetch = 0 : i64, scratch_operands = 2 : i64, tpu.core_type = #tpu.core_type<tc>, window_params = [{transform_indices = @transform_0, window_bounds = array<i64: 8, 4>}, {pipeline_mode = #tpu.pipeline_mode<synchronous>, transform_indices = @transform_1, window_bounds = array<i64: 4, 32>}, {pipeline_mode = #tpu.pipeline_mode<synchronous>, transform_indices = @transform_2, window_bounds = array<i64: 1, 32>}, {pipeline_mode = #tpu.pipeline_mode<synchronous>, transform_indices = @transform_3, window_bounds = array<i64: 32, 32>}, {pipeline_mode = #tpu.pipeline_mode<synchronous>, transform_indices = @transform_4, window_bounds = array<i64: 1, 32>}, {pipeline_mode = #tpu.pipeline_mode<synchronous>, transform_indices = @transform_5, window_bounds = array<i64: 32, 8>}, {pipeline_mode = #tpu.pipeline_mode<synchronous>, transform_indices = @transform_6, window_bounds = array<i64: 1, 8>}, {transform_indices = @transform_7, window_bounds = array<i64: 8, 8, 16>}, {transform_indices = @transform_8, window_bounds = array<i64: 8, 16>}, {transform_indices = @transform_9, window_bounds = array<i64: 1, 1>}, {transform_indices = @transform_10, window_bounds = array<i64: 1, 1>}, {transform_indices = @transform_11, window_bounds = array<i64: 8, 16>}]} {
    %c0_i32 = arith.constant 0 : i32
    %0 = arith.cmpi eq, %arg1, %c0_i32 : i32
    %1 = arith.extui %0 : i1 to i32
    %c0_i32_0 = arith.constant 0 : i32
    %2 = arith.cmpi ne, %1, %c0_i32_0 : i32
    scf.if %2 {
      %c0_32 = arith.constant 0 : index
      %c0_33 = arith.constant 0 : index
      %86 = vector.load %arg2[%c0_32, %c0_33] : memref<8x4xf32, #tpu.memory_space<vmem>>, vector<8x4xf32>
      %c0_34 = arith.constant 0 : index
      %c0_35 = arith.constant 0 : index
      %87 = vector.load %arg3[%c0_34, %c0_35] : memref<4x32xf32, #tpu.memory_space<vmem>>, vector<4x32xf32>
      %cst_36 = arith.constant dense<0.000000e+00> : vector<8x32xf32>
      %88 = tpu.matmul %86, %87, %cst_36 {dimension_numbers = #tpu.dot_dimension_numbers<[1], [0], [0], [1], [0, 0, 1, 1], [], []>} : vector<8x4xf32>, vector<4x32xf32>, vector<8x32xf32> -> vector<8x32xf32>
      %c0_37 = arith.constant 0 : index
      %c0_38 = arith.constant 0 : index
      %89 = vector.load %arg4[%c0_37, %c0_38] : memref<1x32xf32, #tpu.memory_space<vmem>>, vector<1x32xf32>
      %90 = vector.broadcast %89 : vector<1x32xf32> to vector<8x32xf32>
      %91 = arith.addf %88, %90 : vector<8x32xf32>
      %cst_39 = arith.constant 0.000000e+00 : f32
      %92 = vector.broadcast %cst_39 : f32 to vector<8x32xf32>
      %93 = arith.maximumf %91, %92 : vector<8x32xf32>
      %c0_40 = arith.constant 0 : index
      %c0_41 = arith.constant 0 : index
      %94 = vector.load %arg5[%c0_40, %c0_41] : memref<32x32xf32, #tpu.memory_space<vmem>>, vector<32x32xf32>
      %cst_42 = arith.constant dense<0.000000e+00> : vector<8x32xf32>
      %95 = tpu.matmul %93, %94, %cst_42 {dimension_numbers = #tpu.dot_dimension_numbers<[1], [0], [0], [1], [0, 0, 1, 1], [], []>} : vector<8x32xf32>, vector<32x32xf32>, vector<8x32xf32> -> vector<8x32xf32>
      %c0_43 = arith.constant 0 : index
      %c0_44 = arith.constant 0 : index
      %96 = vector.load %arg6[%c0_43, %c0_44] : memref<1x32xf32, #tpu.memory_space<vmem>>, vector<1x32xf32>
      %97 = vector.broadcast %96 : vector<1x32xf32> to vector<8x32xf32>
      %98 = arith.addf %95, %97 : vector<8x32xf32>
      %cst_45 = arith.constant 0.000000e+00 : f32
      %99 = vector.broadcast %cst_45 : f32 to vector<8x32xf32>
      %100 = arith.maximumf %98, %99 : vector<8x32xf32>
      %c0_46 = arith.constant 0 : index
      %c0_47 = arith.constant 0 : index
      %101 = vector.load %arg7[%c0_46, %c0_47] : memref<32x8xf32, #tpu.memory_space<vmem>>, vector<32x8xf32>
      %cst_48 = arith.constant dense<0.000000e+00> : vector<8x8xf32>
      %102 = tpu.matmul %100, %101, %cst_48 {dimension_numbers = #tpu.dot_dimension_numbers<[1], [0], [0], [1], [0, 0, 1, 1], [], []>} : vector<8x32xf32>, vector<32x8xf32>, vector<8x8xf32> -> vector<8x8xf32>
      %c0_49 = arith.constant 0 : index
      %c0_50 = arith.constant 0 : index
      %103 = vector.load %arg8[%c0_49, %c0_50] : memref<1x8xf32, #tpu.memory_space<vmem>>, vector<1x8xf32>
      %104 = vector.broadcast %103 : vector<1x8xf32> to vector<8x8xf32>
      %105 = arith.addf %102, %104 : vector<8x8xf32>
      %c0_51 = arith.constant 0 : index
      %c0_52 = arith.constant 0 : index
      %106 = vector.load %arg14[%c0_51, %c0_52] : memref<8x8xf32, #tpu.memory_space<vmem>>, vector<8x8xf32>
      tpu.vector_store %arg14[%c0_51, %c0_52], %105 {strides = array<i32>} : memref<8x8xf32, #tpu.memory_space<vmem>>, vector<8x8xf32>,
      %cst_53 = arith.constant 0.000000e+00 : f32
      %107 = vector.broadcast %cst_53 : f32 to vector<8x1xf32>
      %c0_54 = arith.constant 0 : index
      %c0_55 = arith.constant 0 : index
      %108 = vector.load %arg15[%c0_54, %c0_55] : memref<8x1xf32, #tpu.memory_space<vmem>>, vector<8x1xf32>
      tpu.vector_store %arg15[%c0_54, %c0_55], %107 {strides = array<i32>} : memref<8x1xf32, #tpu.memory_space<vmem>>, vector<8x1xf32>,
    } else {
    }
    %c0 = arith.constant 0 : index
    %c0_1 = arith.constant 0 : index
    %3 = vector.load %arg14[%c0, %c0_1] : memref<8x8xf32, #tpu.memory_space<vmem>>, vector<8x8xf32>
    %c0_2 = arith.constant 0 : index
    %c0_3 = arith.constant 0 : index
    %4 = memref.load %arg11[%c0_2, %c0_3] : memref<1x1xf32, #tpu.memory_space<smem>>
    %5 = vector.broadcast %4 : f32 to vector<8x16xf32>
    %c0_4 = arith.constant 0 : index
    %c0_5 = arith.constant 0 : index
    %c0_6 = arith.constant 0 : index
    %6 = vector.load %arg9[%c0_4, %c0_5, %c0_6] : memref<8x8x16xbf16, #tpu.memory_space<vmem>>, vector<1x8x16xbf16>
    %7 = vector.shape_cast %6 : vector<1x8x16xbf16> to vector<8x16xbf16>
    %8 = arith.extf %7 : vector<8x16xbf16> to vector<8x16xf32>
    %9 = vector.extract_strided_slice %3 {offsets = [0, 0], sizes = [8, 1], strides = [1, 1]} : vector<8x8xf32> to vector<8x1xf32>
    %10 = vector.broadcast %9 : vector<8x1xf32> to vector<8x16xf32>
    %11 = arith.mulf %8, %10 : vector<8x16xf32>
    %12 = arith.addf %5, %11 : vector<8x16xf32>
    %c1 = arith.constant 1 : index
    %c0_7 = arith.constant 0 : index
    %c0_8 = arith.constant 0 : index
    %13 = vector.load %arg9[%c1, %c0_7, %c0_8] : memref<8x8x16xbf16, #tpu.memory_space<vmem>>, vector<1x8x16xbf16>
    %14 = vector.shape_cast %13 : vector<1x8x16xbf16> to vector<8x16xbf16>
    %15 = arith.extf %14 : vector<8x16xbf16> to vector<8x16xf32>
    %16 = vector.extract_strided_slice %3 {offsets = [0, 1], sizes = [8, 1], strides = [1, 1]} : vector<8x8xf32> to vector<8x1xf32>
    %17 = vector.broadcast %16 : vector<8x1xf32> to vector<8x16xf32>
    %18 = arith.mulf %15, %17 : vector<8x16xf32>
    %19 = arith.addf %12, %18 : vector<8x16xf32>
    %c2 = arith.constant 2 : index
    %c0_9 = arith.constant 0 : index
    %c0_10 = arith.constant 0 : index
    %20 = vector.load %arg9[%c2, %c0_9, %c0_10] : memref<8x8x16xbf16, #tpu.memory_space<vmem>>, vector<1x8x16xbf16>
    %21 = vector.shape_cast %20 : vector<1x8x16xbf16> to vector<8x16xbf16>
    %22 = arith.extf %21 : vector<8x16xbf16> to vector<8x16xf32>
    %23 = vector.extract_strided_slice %3 {offsets = [0, 2], sizes = [8, 1], strides = [1, 1]} : vector<8x8xf32> to vector<8x1xf32>
    %24 = vector.broadcast %23 : vector<8x1xf32> to vector<8x16xf32>
    %25 = arith.mulf %22, %24 : vector<8x16xf32>
    %26 = arith.addf %19, %25 : vector<8x16xf32>
    %c3 = arith.constant 3 : index
    %c0_11 = arith.constant 0 : index
    %c0_12 = arith.constant 0 : index
    %27 = vector.load %arg9[%c3, %c0_11, %c0_12] : memref<8x8x16xbf16, #tpu.memory_space<vmem>>, vector<1x8x16xbf16>
    %28 = vector.shape_cast %27 : vector<1x8x16xbf16> to vector<8x16xbf16>
    %29 = arith.extf %28 : vector<8x16xbf16> to vector<8x16xf32>
    %30 = vector.extract_strided_slice %3 {offsets = [0, 3], sizes = [8, 1], strides = [1, 1]} : vector<8x8xf32> to vector<8x1xf32>
    %31 = vector.broadcast %30 : vector<8x1xf32> to vector<8x16xf32>
    %32 = arith.mulf %29, %31 : vector<8x16xf32>
    %33 = arith.addf %26, %32 : vector<8x16xf32>
    %c4 = arith.constant 4 : index
    %c0_13 = arith.constant 0 : index
    %c0_14 = arith.constant 0 : index
    %34 = vector.load %arg9[%c4, %c0_13, %c0_14] : memref<8x8x16xbf16, #tpu.memory_space<vmem>>, vector<1x8x16xbf16>
    %35 = vector.shape_cast %34 : vector<1x8x16xbf16> to vector<8x16xbf16>
    %36 = arith.extf %35 : vector<8x16xbf16> to vector<8x16xf32>
    %37 = vector.extract_strided_slice %3 {offsets = [0, 4], sizes = [8, 1], strides = [1, 1]} : vector<8x8xf32> to vector<8x1xf32>
    %38 = vector.broadcast %37 : vector<8x1xf32> to vector<8x16xf32>
    %39 = arith.mulf %36, %38 : vector<8x16xf32>
    %40 = arith.addf %33, %39 : vector<8x16xf32>
    %c5 = arith.constant 5 : index
    %c0_15 = arith.constant 0 : index
    %c0_16 = arith.constant 0 : index
    %41 = vector.load %arg9[%c5, %c0_15, %c0_16] : memref<8x8x16xbf16, #tpu.memory_space<vmem>>, vector<1x8x16xbf16>
    %42 = vector.shape_cast %41 : vector<1x8x16xbf16> to vector<8x16xbf16>
    %43 = arith.extf %42 : vector<8x16xbf16> to vector<8x16xf32>
    %44 = vector.extract_strided_slice %3 {offsets = [0, 5], sizes = [8, 1], strides = [1, 1]} : vector<8x8xf32> to vector<8x1xf32>
    %45 = vector.broadcast %44 : vector<8x1xf32> to vector<8x16xf32>
    %46 = arith.mulf %43, %45 : vector<8x16xf32>
    %47 = arith.addf %40, %46 : vector<8x16xf32>
    %c6 = arith.constant 6 : index
    %c0_17 = arith.constant 0 : index
    %c0_18 = arith.constant 0 : index
    %48 = vector.load %arg9[%c6, %c0_17, %c0_18] : memref<8x8x16xbf16, #tpu.memory_space<vmem>>, vector<1x8x16xbf16>
    %49 = vector.shape_cast %48 : vector<1x8x16xbf16> to vector<8x16xbf16>
    %50 = arith.extf %49 : vector<8x16xbf16> to vector<8x16xf32>
    %51 = vector.extract_strided_slice %3 {offsets = [0, 6], sizes = [8, 1], strides = [1, 1]} : vector<8x8xf32> to vector<8x1xf32>
    %52 = vector.broadcast %51 : vector<8x1xf32> to vector<8x16xf32>
    %53 = arith.mulf %50, %52 : vector<8x16xf32>
    %54 = arith.addf %47, %53 : vector<8x16xf32>
    %c7 = arith.constant 7 : index
    %c0_19 = arith.constant 0 : index
    %c0_20 = arith.constant 0 : index
    %55 = vector.load %arg9[%c7, %c0_19, %c0_20] : memref<8x8x16xbf16, #tpu.memory_space<vmem>>, vector<1x8x16xbf16>
    %56 = vector.shape_cast %55 : vector<1x8x16xbf16> to vector<8x16xbf16>
    %57 = arith.extf %56 : vector<8x16xbf16> to vector<8x16xf32>
    %58 = vector.extract_strided_slice %3 {offsets = [0, 7], sizes = [8, 1], strides = [1, 1]} : vector<8x8xf32> to vector<8x1xf32>
    %59 = vector.broadcast %58 : vector<8x1xf32> to vector<8x16xf32>
    %60 = arith.mulf %57, %59 : vector<8x16xf32>
    %61 = arith.addf %54, %60 : vector<8x16xf32>
    %c0_21 = arith.constant 0 : index
    %c0_22 = arith.constant 0 : index
    %62 = vector.load %arg10[%c0_21, %c0_22] : memref<8x16xf32, #tpu.memory_space<vmem>>, vector<8x16xf32>
    %63 = arith.subf %62, %61 : vector<8x16xf32>
    %64 = tpu.iota {dimensions = array<i32: 0>} : vector<16x16xi32>
    %65 = tpu.iota {dimensions = array<i32: 1>} : vector<16x16xi32>
    %c1_i32 = arith.constant 1 : i32
    %66 = vector.broadcast %c1_i32 : i32 to vector<16x16xi32>
    %67 = arith.addi %64, %66 : vector<16x16xi32>
    %68 = arith.cmpi eq, %67, %65 : vector<16x16xi32>
    %69 = arith.extui %68 : vector<16x16xi1> to vector<16x16xi32>
    %70 = arith.sitofp %69 : vector<16x16xi32> to vector<16x16xf32>
    %cst = arith.constant dense<0.000000e+00> : vector<8x16xf32>
    %71 = tpu.matmul %63, %70, %cst {dimension_numbers = #tpu.dot_dimension_numbers<[1], [0], [0], [1], [0, 0, 1, 1], [], []>, precision = #tpu.contract_precision<fp32>} : vector<8x16xf32>, vector<16x16xf32>, vector<8x16xf32> -> vector<8x16xf32>
    %72 = tpu.iota {dimensions = array<i32: 1>} : vector<8x16xi32>
    %c0_i32_23 = arith.constant 0 : i32
    %73 = vector.broadcast %c0_i32_23 : i32 to vector<8x16xi32>
    %74 = arith.cmpi eq, %72, %73 : vector<8x16xi32>
    %c0_24 = arith.constant 0 : index
    %c0_25 = arith.constant 0 : index
    %75 = vector.load %arg15[%c0_24, %c0_25] : memref<8x1xf32, #tpu.memory_space<vmem>>, vector<8x1xf32>
    %76 = vector.shape_cast %75 : vector<8x1xf32> to vector<8x1xf32>
    %77 = vector.broadcast %76 : vector<8x1xf32> to vector<8x16xf32>
    %78 = arith.select %74, %77, %71 : vector<8x16xi1>, vector<8x16xf32>
    %79 = vector.extract_strided_slice %63 {offsets = [0, 15], sizes = [8, 1], strides = [1, 1]} : vector<8x16xf32> to vector<8x1xf32>
    %c0_26 = arith.constant 0 : index
    %c0_27 = arith.constant 0 : index
    %80 = vector.load %arg15[%c0_26, %c0_27] : memref<8x1xf32, #tpu.memory_space<vmem>>, vector<8x1xf32>
    tpu.vector_store %arg15[%c0_26, %c0_27], %79 {strides = array<i32>} : memref<8x1xf32, #tpu.memory_space<vmem>>, vector<8x1xf32>,
    %c0_28 = arith.constant 0 : index
    %c0_29 = arith.constant 0 : index
    %81 = memref.load %arg12[%c0_28, %c0_29] : memref<1x1xf32, #tpu.memory_space<smem>>
    %82 = vector.broadcast %81 : f32 to vector<8x16xf32>
    %83 = arith.mulf %82, %78 : vector<8x16xf32>
    %84 = arith.addf %61, %83 : vector<8x16xf32>
    %c0_30 = arith.constant 0 : index
    %c0_31 = arith.constant 0 : index
    %85 = vector.load %arg13[%c0_30, %c0_31] : memref<8x16xf32, #tpu.memory_space<vmem>>, vector<8x16xf32>
    tpu.vector_store %arg13[%c0_30, %c0_31], %84 {strides = array<i32>} : memref<8x16xf32, #tpu.memory_space<vmem>>, vector<8x16xf32>,
    return
  }
  func.func @transform_0(%arg0: i32, %arg1: i32) -> (i32, i32) {
    %c0_i32 = arith.constant 0 : i32
    %c0_i32_0 = arith.constant 0 : i32
    return %arg0, %c0_i32 : i32, i32
  }
  func.func @transform_1(%arg0: i32, %arg1: i32) -> (i32, i32) {
    %c0_i32 = arith.constant 0 : i32
    %c0_i32_0 = arith.constant 0 : i32
    %c0_i32_1 = arith.constant 0 : i32
    return %c0_i32, %c0_i32_0 : i32, i32
  }
  func.func @transform_2(%arg0: i32, %arg1: i32) -> (i32, i32) {
    %c0_i32 = arith.constant 0 : i32
    %c0_i32_0 = arith.constant 0 : i32
    %c0_i32_1 = arith.constant 0 : i32
    return %c0_i32, %c0_i32_0 : i32, i32
  }
  func.func @transform_3(%arg0: i32, %arg1: i32) -> (i32, i32) {
    %c0_i32 = arith.constant 0 : i32
    %c0_i32_0 = arith.constant 0 : i32
    %c0_i32_1 = arith.constant 0 : i32
    return %c0_i32, %c0_i32_0 : i32, i32
  }
  func.func @transform_4(%arg0: i32, %arg1: i32) -> (i32, i32) {
    %c0_i32 = arith.constant 0 : i32
    %c0_i32_0 = arith.constant 0 : i32
    %c0_i32_1 = arith.constant 0 : i32
    return %c0_i32, %c0_i32_0 : i32, i32
  }
  func.func @transform_5(%arg0: i32, %arg1: i32) -> (i32, i32) {
    %c0_i32 = arith.constant 0 : i32
    %c0_i32_0 = arith.constant 0 : i32
    %c0_i32_1 = arith.constant 0 : i32
    return %c0_i32, %c0_i32_0 : i32, i32
  }
  func.func @transform_6(%arg0: i32, %arg1: i32) -> (i32, i32) {
    %c0_i32 = arith.constant 0 : i32
    %c0_i32_0 = arith.constant 0 : i32
    %c0_i32_1 = arith.constant 0 : i32
    return %c0_i32, %c0_i32_0 : i32, i32
  }
  func.func @transform_7(%arg0: i32, %arg1: i32) -> (i32, i32, i32) {
    %c0_i32 = arith.constant 0 : i32
    %c0_i32_0 = arith.constant 0 : i32
    return %c0_i32, %arg0, %arg1 : i32, i32, i32
  }
  func.func @transform_8(%arg0: i32, %arg1: i32) -> (i32, i32) {
    %c0_i32 = arith.constant 0 : i32
    return %arg0, %arg1 : i32, i32
  }
  func.func @transform_9(%arg0: i32, %arg1: i32) -> (i32, i32) {
    %c0_i32 = arith.constant 0 : i32
    %c0_i32_0 = arith.constant 0 : i32
    %c0_i32_1 = arith.constant 0 : i32
    return %c0_i32, %c0_i32_0 : i32, i32
  }
  func.func @transform_10(%arg0: i32, %arg1: i32) -> (i32, i32) {
    %c0_i32 = arith.constant 0 : i32
    %c0_i32_0 = arith.constant 0 : i32
    %c0_i32_1 = arith.constant 0 : i32
    return %c0_i32, %c0_i32_0 : i32, i32
  }
  func.func @transform_11(%arg0: i32, %arg1: i32) -> (i32, i32) {
    %c0_i32 = arith.constant 0 : i32
    return %arg0, %arg1 : i32, i32
  }
}

</mosaic_0001>

<llo_original>
// kernel: tpu_custom_call.1
$region0: #{tpu_custom_call.1}
  #allocation0 [shape = 'u32[]', space=smem, size = 0x4, offset = 0x4, fixed_abs, tag = 'smem constant byte address 0x4 - core index']
  #allocation1 [shape = 'u32[144,128]{1,0:T(1,128)}', space=vmem, size = 0x12000, scoped, tag = 'internal scratch']
  #allocation2 [shape = 'f32[8,8]{1,0:T(8,128)}', space=vmem, size = 0x1000, scoped, tag = 'scratch operand']
  #allocation3 [shape = 'f32[8,1]{1,0:T(8,128)}', space=vmem, size = 0x1000, scoped, tag = 'scratch operand']
  #allocation4 [shape = 'f32[1,1]{1,0:T(1,128)S(6)}', space=smem, size = 0x200, scoped, tag = 'scoped memory for tpu_custom_call.1']
  #allocation5 [shape = 'f32[1,1]{1,0:T(1,128)S(6)}', space=smem, size = 0x200, scoped, tag = 'scoped memory for tpu_custom_call.1']
  %s0 = inlined_call_operand.vmem [shape: f32[24,4], index: 0, kind: input, shape index: {}]
  %s1 = inlined_call_operand.vmem [shape: f32[4,32], index: 1, kind: input, shape index: {}]
  %s2 = inlined_call_operand.vmem [shape: f32[1,32], index: 2, kind: input, shape index: {}]
  %s3 = inlined_call_operand.vmem [shape: f32[32,32], index: 3, kind: input, shape index: {}]
  %s4 = inlined_call_operand.vmem [shape: f32[1,32], index: 4, kind: input, shape index: {}]
  %s5 = inlined_call_operand.vmem [shape: f32[32,8], index: 5, kind: input, shape index: {}]
  %s6 = inlined_call_operand.vmem [shape: f32[1,8], index: 6, kind: input, shape index: {}]
  %s7 = inlined_call_operand.vmem [shape: bf16[8,24,16], index: 7, kind: input, shape index: {}]
  %s8 = inlined_call_operand.vmem [shape: f32[24,16], index: 8, kind: input, shape index: {}]
  %s9 = inlined_call_operand.<no memory space> [shape: f32[1,1], index: 9, kind: input, shape index: {}]
  %s10 = inlined_call_operand.<no memory space> [shape: f32[1,1], index: 10, kind: input, shape index: {}]
  %s11 = inlined_call_operand.vmem [shape: f32[24,16], index: 11, kind: output, shape index: {}]
  %s12 = sld [smem:[#allocation0]]
  $region122: #{tpu_custom_call.1} parent=0
    _
  %s14 = ssub.s32 1, %s12
  %s15 = scalar_select 0, %s14, %s12
  %16 = sst [smem:[#allocation4]] %s9
  %17 = sst [smem:[#allocation5]] %s10
  $region1: #{tpu_custom_call.1} parent=0
    #allocation6 [shape = 'u8[32768]{0}', space=vmem, size = 0x8000, scoped, tag = 'input window, operand 7']
    loop: start=0, step=1, limit=5
    $region2: #{tpu_custom_call.1} parent=1 // loop_pre_header
      _
    $region3: #{tpu_custom_call.1} parent=1 // loop_header
      %s19 = sphi 0, %s23
      %p20 = scmp.ge.s32.totalorder %s19, 5
      %s26 = sphi 0, %s38
      %s27 = sphi 0, %s34
      %s28 = sphi 0, %s26
      %s29 = sphi 0, %s27
      %s30 = sphi 0, %s28
      %s31 = sphi 0, %s29
      %s41 = sphi 0, %s43
      %s44 = sphi 0, %s41
      %s45 = sphi 0, %s44
      %s61 = sphi 0, %s45
      %s65 = sphi 0, %s65
      %s67 = sphi 0, %s65
      %s68 = sphi 0, %s67
      %s82 = sphi 0, %s68
      %s86 = sphi 0, %s86
      %s88 = sphi 0, %s86
      %s89 = sphi 0, %s88
      %s103 = sphi 0, %s89
      %s107 = sphi 0, %s107
      %s109 = sphi 0, %s107
      %s110 = sphi 0, %s109
      %s124 = sphi 0, %s110
      %s128 = sphi 0, %s128
      %s130 = sphi 0, %s128
      %s131 = sphi 0, %s130
      %s145 = sphi 0, %s131
      %s149 = sphi 0, %s149
      %s151 = sphi 0, %s149
      %s152 = sphi 0, %s151
      %s166 = sphi 0, %s152
      %s170 = sphi 0, %s170
      %s172 = sphi 0, %s170
      %s173 = sphi 0, %s172
      %s187 = sphi 0, %s173
      %s195 = sphi 0, %s197
      %s198 = sphi 0, %s195
      %s199 = sphi 0, %s198
      %s215 = sphi 0, %s199
      %s223 = sphi 0, %s225
      %s226 = sphi 0, %s223
      %s227 = sphi 0, %s226
      %s243 = sphi 0, %s227
      %s247 = sphi 0, %s247
      %s249 = sphi 0, %s247
      %s250 = sphi 0, %s249
      %s264 = sphi 0, %s250
      %s268 = sphi 0, %s268
      %s270 = sphi 0, %s268
      %s271 = sphi 0, %s270
      %s285 = sphi 0, %s271
      %s293 = sphi 0, %s295
      %s296 = sphi 0, %s293
      %s297 = sphi 0, %s296
      %s313 = sphi 0, %s297
    $region4: #{tpu_custom_call.1} parent=1 // loop_header_branch
      %22 = sbr.rel (%p20) target = $region8
    $region5: #{tpu_custom_call.1} parent=1 // loop_body
      %s24 = ssub.s32 %s19, 1
      %s25 = ssub.s32 %s19, 2
      %s32 = sadd.s32 1, %s27
      %p33 = scmp.ge.s32.totalorder %s32, 1
      %s34 = scalar_select %p33, 0, %s32
      %s35 = sadd.s32 1, %s26
      %s36 = scalar_select %p33, %s35, %s26
      %p37 = scmp.ge.s32.totalorder %s36, 3
      %s38 = scalar_select %p37, 0, %s36
      %s39 = ssub.s32 %s26, %s38
      %p40 = scmp.eq.s32.totalorder %s39, 0
      %s42 = sadd.s32 %s41, 1
      %s43 = scalar_select %p40, %s41, %s42
      %p46 = pneg %p40
      %p47 = scmp.eq.s32.totalorder %s19, 2
      %p48 = por %p46, %p47
      %p49 = scmp.ne.s32.totalorder %s41, %s44
      %p50 = scmp.eq.s32.totalorder %s19, 0
      %p51 = por %p49, %p50
      %p52 = scmp.ne.s32.totalorder %s41, %s44
      %p53 = scmp.eq.s32.totalorder %s24, 2
      %p54 = por %p52, %p53
      %p55 = scmp.ne.s32.totalorder %s44, %s45
      %p56 = scmp.eq.s32.totalorder %s24, 0
      %p57 = por %p55, %p56
      %p58 = scmp.ne.s32.totalorder %s44, %s45
      %p59 = scmp.eq.s32.totalorder %s25, 2
      %p60 = por %p58, %p59
      %p62 = scmp.ne.s32.totalorder %s45, %s61
      %p63 = scmp.eq.s32.totalorder %s25, 0
      %p64 = por %p62, %p63
      %s66 = sadd.s32 %s65, 1
      %p69 = scmp.eq.s32.totalorder %s19, 2
      %p70 = scmp.ne.s32.totalorder %s65, %s67
      %p71 = scmp.eq.s32.totalorder %s19, 0
      %p72 = por %p70, %p71
      %p73 = scmp.ne.s32.totalorder %s65, %s67
      %p74 = scmp.eq.s32.totalorder %s24, 2
      %p75 = por %p73, %p74
      %p76 = scmp.ne.s32.totalorder %s67, %s68
      %p77 = scmp.eq.s32.totalorder %s24, 0
      %p78 = por %p76, %p77
      %p79 = scmp.ne.s32.totalorder %s67, %s68
      %p80 = scmp.eq.s32.totalorder %s25, 2
      %p81 = por %p79, %p80
      %p83 = scmp.ne.s32.totalorder %s68, %s82
      %p84 = scmp.eq.s32.totalorder %s25, 0
      %p85 = por %p83, %p84
      %s87 = sadd.s32 %s86, 1
      %p90 = scmp.eq.s32.totalorder %s19, 2
      %p91 = scmp.ne.s32.totalorder %s86, %s88
      %p92 = scmp.eq.s32.totalorder %s19, 0
      %p93 = por %p91, %p92
      %p94 = scmp.ne.s32.totalorder %s86, %s88
      %p95 = scmp.eq.s32.totalorder %s24, 2
      %p96 = por %p94, %p95
      %p97 = scmp.ne.s32.totalorder %s88, %s89
      %p98 = scmp.eq.s32.totalorder %s24, 0
      %p99 = por %p97, %p98
      %p100 = scmp.ne.s32.totalorder %s88, %s89
      %p101 = scmp.eq.s32.totalorder %s25, 2
      %p102 = por %p100, %p101
      %p104 = scmp.ne.s32.totalorder %s89, %s103
      %p105 = scmp.eq.s32.totalorder %s25, 0
      %p106 = por %p104, %p105
      %s108 = sadd.s32 %s107, 1
      %p111 = scmp.eq.s32.totalorder %s19, 2
      %p112 = scmp.ne.s32.totalorder %s107, %s109
      %p113 = scmp.eq.s32.totalorder %s19, 0
      %p114 = por %p112, %p113
      %p115 = scmp.ne.s32.totalorder %s107, %s109
      %p116 = scmp.eq.s32.totalorder %s24, 2
      %p117 = por %p115, %p116
      %p118 = scmp.ne.s32.totalorder %s109, %s110
      %p119 = scmp.eq.s32.totalorder %s24, 0
      %p120 = por %p118, %p119
      %p121 = scmp.ne.s32.totalorder %s109, %s110
      %p122 = scmp.eq.s32.totalorder %s25, 2
      %p123 = por %p121, %p122
      %p125 = scmp.ne.s32.totalorder %s110, %s124
      %p126 = scmp.eq.s32.totalorder %s25, 0
      %p127 = por %p125, %p126
      %s129 = sadd.s32 %s128, 1
      %p132 = scmp.eq.s32.totalorder %s19, 2
      %p133 = scmp.ne.s32.totalorder %s128, %s130
      %p134 = scmp.eq.s32.totalorder %s19, 0
      %p135 = por %p133, %p134
      %p136 = scmp.ne.s32.totalorder %s128, %s130
      %p137 = scmp.eq.s32.totalorder %s24, 2
      %p138 = por %p136, %p137
      %p139 = scmp.ne.s32.totalorder %s130, %s131
      %p140 = scmp.eq.s32.totalorder %s24, 0
      %p141 = por %p139, %p140
      %p142 = scmp.ne.s32.totalorder %s130, %s131
      %p143 = scmp.eq.s32.totalorder %s25, 2
      %p144 = por %p142, %p143
      %p146 = scmp.ne.s32.totalorder %s131, %s145
      %p147 = scmp.eq.s32.totalorder %s25, 0
      %p148 = por %p146, %p147
      %s150 = sadd.s32 %s149, 1
      %p153 = scmp.eq.s32.totalorder %s19, 2
      %p154 = scmp.ne.s32.totalorder %s149, %s151
      %p155 = scmp.eq.s32.totalorder %s19, 0
      %p156 = por %p154, %p155
      %p157 = scmp.ne.s32.totalorder %s149, %s151
      %p158 = scmp.eq.s32.totalorder %s24, 2
      %p159 = por %p157, %p158
      %p160 = scmp.ne.s32.totalorder %s151, %s152
      %p161 = scmp.eq.s32.totalorder %s24, 0
      %p162 = por %p160, %p161
      %p163 = scmp.ne.s32.totalorder %s151, %s152
      %p164 = scmp.eq.s32.totalorder %s25, 2
      %p165 = por %p163, %p164
      %p167 = scmp.ne.s32.totalorder %s152, %s166
      %p168 = scmp.eq.s32.totalorder %s25, 0
      %p169 = por %p167, %p168
      %s171 = sadd.s32 %s170, 1
      %p174 = scmp.eq.s32.totalorder %s19, 2
      %p175 = scmp.ne.s32.totalorder %s170, %s172
      %p176 = scmp.eq.s32.totalorder %s19, 0
      %p177 = por %p175, %p176
      %p178 = scmp.ne.s32.totalorder %s170, %s172
      %p179 = scmp.eq.s32.totalorder %s24, 2
      %p180 = por %p178, %p179
      %p181 = scmp.ne.s32.totalorder %s172, %s173
      %p182 = scmp.eq.s32.totalorder %s24, 0
      %p183 = por %p181, %p182
      %p184 = scmp.ne.s32.totalorder %s172, %s173
      %p185 = scmp.eq.s32.totalorder %s25, 2
      %p186 = por %p184, %p185
      %p188 = scmp.ne.s32.totalorder %s173, %s187
      %p189 = scmp.eq.s32.totalorder %s25, 0
      %p190 = por %p188, %p189
      %s191 = ssub.s32 %s26, %s38
      %s192 = ssub.s32 %s27, %s34
      %s193 = sor.u32 %s191, %s192
      %p194 = scmp.eq.s32.totalorder %s193, 0
      %s196 = sadd.s32 %s195, 1
      %s197 = scalar_select %p194, %s195, %s196
      %p200 = pneg %p194
      %p201 = scmp.eq.s32.totalorder %s19, 2
      %p202 = por %p200, %p201
      %p203 = scmp.ne.s32.totalorder %s195, %s198
      %p204 = scmp.eq.s32.totalorder %s19, 0
      %p205 = por %p203, %p204
      %p206 = scmp.ne.s32.totalorder %s195, %s198
      %p207 = scmp.eq.s32.totalorder %s24, 2
      %p208 = por %p206, %p207
      %p209 = scmp.ne.s32.totalorder %s198, %s199
      %p210 = scmp.eq.s32.totalorder %s24, 0
      %p211 = por %p209, %p210
      %p212 = scmp.ne.s32.totalorder %s198, %s199
      %p213 = scmp.eq.s32.totalorder %s25, 2
      %p214 = por %p212, %p213
      %p216 = scmp.ne.s32.totalorder %s199, %s215
      %p217 = scmp.eq.s32.totalorder %s25, 0
      %p218 = por %p216, %p217
      %s219 = ssub.s32 %s26, %s38
      %s220 = ssub.s32 %s27, %s34
      %s221 = sor.u32 %s219, %s220
      %p222 = scmp.eq.s32.totalorder %s221, 0
      %s224 = sadd.s32 %s223, 1
      %s225 = scalar_select %p222, %s223, %s224
      %p228 = pneg %p222
      %p229 = scmp.eq.s32.totalorder %s19, 2
      %p230 = por %p228, %p229
      %p231 = scmp.ne.s32.totalorder %s223, %s226
      %p232 = scmp.eq.s32.totalorder %s19, 0
      %p233 = por %p231, %p232
      %p234 = scmp.ne.s32.totalorder %s223, %s226
      %p235 = scmp.eq.s32.totalorder %s24, 2
      %p236 = por %p234, %p235
      %p237 = scmp.ne.s32.totalorder %s226, %s227
      %p238 = scmp.eq.s32.totalorder %s24, 0
      %p239 = por %p237, %p238
      %p240 = scmp.ne.s32.totalorder %s226, %s227
      %p241 = scmp.eq.s32.totalorder %s25, 2
      %p242 = por %p240, %p241
      %p244 = scmp.ne.s32.totalorder %s227, %s243
      %p245 = scmp.eq.s32.totalorder %s25, 0
      %p246 = por %p244, %p245
      %s248 = sadd.s32 %s247, 1
      %p251 = scmp.eq.s32.totalorder %s19, 2
      %p252 = scmp.ne.s32.totalorder %s247, %s249
      %p253 = scmp.eq.s32.totalorder %s19, 0
      %p254 = por %p252, %p253
      %p255 = scmp.ne.s32.totalorder %s247, %s249
      %p256 = scmp.eq.s32.totalorder %s24, 2
      %p257 = por %p255, %p256
      %p258 = scmp.ne.s32.totalorder %s249, %s250
      %p259 = scmp.eq.s32.totalorder %s24, 0
      %p260 = por %p258, %p259
      %p261 = scmp.ne.s32.totalorder %s249, %s250
      %p262 = scmp.eq.s32.totalorder %s25, 2
      %p263 = por %p261, %p262
      %p265 = scmp.ne.s32.totalorder %s250, %s264
      %p266 = scmp.eq.s32.totalorder %s25, 0
      %p267 = por %p265, %p266
      %s269 = sadd.s32 %s268, 1
      %p272 = scmp.eq.s32.totalorder %s19, 2
      %p273 = scmp.ne.s32.totalorder %s268, %s270
      %p274 = scmp.eq.s32.totalorder %s19, 0
      %p275 = por %p273, %p274
      %p276 = scmp.ne.s32.totalorder %s268, %s270
      %p277 = scmp.eq.s32.totalorder %s24, 2
      %p278 = por %p276, %p277
      %p279 = scmp.ne.s32.totalorder %s270, %s271
      %p280 = scmp.eq.s32.totalorder %s24, 0
      %p281 = por %p279, %p280
      %p282 = scmp.ne.s32.totalorder %s270, %s271
      %p283 = scmp.eq.s32.totalorder %s25, 2
      %p284 = por %p282, %p283
      %p286 = scmp.ne.s32.totalorder %s271, %s285
      %p287 = scmp.eq.s32.totalorder %s25, 0
      %p288 = por %p286, %p287
      %s289 = ssub.s32 %s26, %s38
      %s290 = ssub.s32 %s27, %s34
      %s291 = sor.u32 %s289, %s290
      %p292 = scmp.eq.s32.totalorder %s291, 0
      %s294 = sadd.s32 %s293, 1
      %s295 = scalar_select %p292, %s293, %s294
      %p298 = pneg %p292
      %p299 = scmp.eq.s32.totalorder %s19, 2
      %p300 = por %p298, %p299
      %p301 = scmp.ne.s32.totalorder %s293, %s296
      %p302 = scmp.eq.s32.totalorder %s19, 0
      %p303 = por %p301, %p302
      %p304 = scmp.ne.s32.totalorder %s293, %s296
      %p305 = scmp.eq.s32.totalorder %s24, 2
      %p306 = por %p304, %p305
      %p307 = scmp.ne.s32.totalorder %s296, %s297
      %p308 = scmp.eq.s32.totalorder %s24, 0
      %p309 = por %p307, %p308
      %p310 = scmp.ne.s32.totalorder %s296, %s297
      %p311 = scmp.eq.s32.totalorder %s25, 2
      %p312 = por %p310, %p311
      %p314 = scmp.ne.s32.totalorder %s297, %s313
      %p315 = scmp.eq.s32.totalorder %s25, 0
      %p316 = por %p314, %p315
      %p317 = scmp.le.s32.totalorder 1, %s19
      %p318 = scmp.lt.s32.totalorder %s19, 4
      %p319 = pnand %p317, %p318
      %p320 = pneg %p319
      // Predicated region
      $region9: #{tpu_custom_call.1} parent=5 // pred_check
        _
      $region10: #{tpu_custom_call.1} parent=5 // pred_check_branch
        %322 = sbr.rel (%p319) target = $region12
      $region11: #{tpu_custom_call.1} parent=5 // pred_region
        %s323 = ssub.s32 %s19, 1
        // Predicated region
        $region13: #{tpu_custom_call.1} parent=11 // pred_check
          %p324 = pneg %p78
        $region14: #{tpu_custom_call.1} parent=11 // pred_check_branch
          %326 = sbr.rel (%p324) target = $region16
        $region15: #{tpu_custom_call.1} parent=11 // pred_region
          _
        $region16: #{tpu_custom_call.1} parent=11 // pred_fallthru
          _
        // Predicated region
        $region17: #{tpu_custom_call.1} parent=11 // pred_check
          %p327 = pneg %p99
        $region18: #{tpu_custom_call.1} parent=11 // pred_check_branch
          %329 = sbr.rel (%p327) target = $region20
        $region19: #{tpu_custom_call.1} parent=11 // pred_region
          _
        $region20: #{tpu_custom_call.1} parent=11 // pred_fallthru
          _
        // Predicated region
        $region21: #{tpu_custom_call.1} parent=11 // pred_check
          %p330 = pneg %p120
        $region22: #{tpu_custom_call.1} parent=11 // pred_check_branch
          %332 = sbr.rel (%p330) target = $region24
        $region23: #{tpu_custom_call.1} parent=11 // pred_region
          _
        $region24: #{tpu_custom_call.1} parent=11 // pred_fallthru
          _
        // Predicated region
        $region25: #{tpu_custom_call.1} parent=11 // pred_check
          %p333 = pneg %p141
        $region26: #{tpu_custom_call.1} parent=11 // pred_check_branch
          %335 = sbr.rel (%p333) target = $region28
        $region27: #{tpu_custom_call.1} parent=11 // pred_region
          _
        $region28: #{tpu_custom_call.1} parent=11 // pred_fallthru
          _
        // Predicated region
        $region29: #{tpu_custom_call.1} parent=11 // pred_check
          %p336 = pneg %p162
        $region30: #{tpu_custom_call.1} parent=11 // pred_check_branch
          %338 = sbr.rel (%p336) target = $region32
        $region31: #{tpu_custom_call.1} parent=11 // pred_region
          _
        $region32: #{tpu_custom_call.1} parent=11 // pred_fallthru
          _
        // Predicated region
        $region33: #{tpu_custom_call.1} parent=11 // pred_check
          %p339 = pneg %p183
        $region34: #{tpu_custom_call.1} parent=11 // pred_check_branch
          %341 = sbr.rel (%p339) target = $region36
        $region35: #{tpu_custom_call.1} parent=11 // pred_region
          _
        $region36: #{tpu_custom_call.1} parent=11 // pred_fallthru
          _
        // Predicated region
        $region37: #{tpu_custom_call.1} parent=11 // pred_check
          %p342 = pneg %p260
        $region38: #{tpu_custom_call.1} parent=11 // pred_check_branch
          %344 = sbr.rel (%p342) target = $region40
        $region39: #{tpu_custom_call.1} parent=11 // pred_region
          _
        $region40: #{tpu_custom_call.1} parent=11 // pred_fallthru
          _
        // Predicated region
        $region41: #{tpu_custom_call.1} parent=11 // pred_check
          %p345 = pneg %p281
        $region42: #{tpu_custom_call.1} parent=11 // pred_check_branch
          %347 = sbr.rel (%p345) target = $region44
        $region43: #{tpu_custom_call.1} parent=11 // pred_region
          _
        $region44: #{tpu_custom_call.1} parent=11 // pred_fallthru
          _
      $region12: #{tpu_custom_call.1} parent=5 // pred_fallthru
        _
      %p348 = scmp.lt.s32.totalorder %s19, 3
      // Predicated region
      $region45: #{tpu_custom_call.1} parent=5 // pred_check
        %p349 = pneg %p348
      $region46: #{tpu_custom_call.1} parent=5 // pred_check_branch
        %351 = sbr.rel (%p349) target = $region48
      $region47: #{tpu_custom_call.1} parent=5 // pred_region
        // Predicated region
        $region49: #{tpu_custom_call.1} parent=47 // pred_check
          %p352 = pneg %p51
        $region50: #{tpu_custom_call.1} parent=47 // pred_check_branch
          %354 = sbr.rel (%p352) target = $region52
        $region51: #{tpu_custom_call.1} parent=47 // pred_region
          %p355 = scmp.lt.s32.totalorder %s26, 2
          %s356 = scalar_select %p355, %s26, 2
          %s357 = smul.addr %s356, 8
          %s358 = scalar_lea.vmem %s0, %s357
        $region52: #{tpu_custom_call.1} parent=47 // pred_fallthru
          _
        // Predicated region
        $region53: #{tpu_custom_call.1} parent=47 // pred_check
          %p359 = pneg %p205
        $region54: #{tpu_custom_call.1} parent=47 // pred_check_branch
          %361 = sbr.rel (%p359) target = $region56
        $region55: #{tpu_custom_call.1} parent=47 // pred_region
          %s362 = sand.u32 %s195, 1
          %s363 = sand.u32 %s195, 1
          %s364 = smul.addr %s363, 32
          %s365 = scalar_lea.vmem [#allocation6], %s364
          %s366 = sadd.s32 %s27, %s26
          %s367 = smul.addr %s366, 4
          %s368 = scalar_lea.vmem %s7, %s367
          // Predicated region
          $region57: #{tpu_custom_call.1} parent=55 // pred_check
            _
          $region58: #{tpu_custom_call.1} parent=55 // pred_check_branch
            %370 = sbr.rel (0) target = $region60
          $region59: #{tpu_custom_call.1} parent=55 // pred_region
            // Predicated region
            $region61: #{tpu_custom_call.1} parent=59 // pred_check
              _
            $region62: #{tpu_custom_call.1} parent=59 // pred_check_branch
              %372 = sbr.rel target = $region64
            $region63: #{tpu_custom_call.1} parent=59 // pred_region
              // Predicated region
              $region76: #{tpu_custom_call.1} parent=63 // pred_check
                _
              $region77: #{tpu_custom_call.1} parent=63 // pred_check_branch
                %402 = sbr.rel (0) target = $region79
              $region78: #{tpu_custom_call.1} parent=63 // pred_region
                loop: start=0, step=1, limit=1
                $region80: #{tpu_custom_call.1} parent=78 // loop_pre_header
                  _
                $region81: #{tpu_custom_call.1} parent=78 // loop_header
                  %s404 = sphi 0, %s408
                  %p405 = scmp.ge.s32.totalorder %s404, 1
                  %s409 = sphi %s368, %s368
                  %s410 = sphi %s365, %s365
                $region82: #{tpu_custom_call.1} parent=78 // loop_header_branch
                  %407 = sbr.rel (%p405) target = $region86
                $region83: #{tpu_custom_call.1} parent=78 // loop_body
                  _
                $region84: #{tpu_custom_call.1} parent=78 // loop_footer
                  %s408 = sadd.s32 1, %s404
                $region85: #{tpu_custom_call.1} parent=78 // loop_footer_branch
                  %403 = sbr.rel target = $region81
                $region86: #{tpu_custom_call.1} parent=78 // loop_exit
                  _
                %s412 = ssub.s32 16, 1
                loop: start=0, step=1, limit=1
                $region87: #{tpu_custom_call.1} parent=78 // loop_pre_header
                  _
                $region88: #{tpu_custom_call.1} parent=78 // loop_header
                  %s414 = sphi 0, %s418
                  %p415 = scmp.ge.s32.totalorder %s414, 1
                  %s419 = sphi %s368, %s368
                  %s420 = sphi %s365, %s365
                $region89: #{tpu_custom_call.1} parent=78 // loop_header_branch
                  %417 = sbr.rel (%p415) target = $region93
                $region90: #{tpu_custom_call.1} parent=78 // loop_body
                  %v421 = vld [vmem:[%s419] sm:%s412]
                  %422 = vst [vmem:[%s420] sm:%s412] %v421
                  %v423 = vld [vmem:[%s419 + $0xc] sm:%s412]
                  %424 = vst [vmem:[%s420 + $0x4] sm:%s412] %v423
                  %v425 = vld [vmem:[%s419 + $0x18] sm:%s412]
                  %426 = vst [vmem:[%s420 + $0x8] sm:%s412] %v425
                  %v427 = vld [vmem:[%s419 + $0x24] sm:%s412]
                  %428 = vst [vmem:[%s420 + $0xc] sm:%s412] %v427
                  %v429 = vld [vmem:[%s419 + $0x30] sm:%s412]
                  %430 = vst [vmem:[%s420 + $0x10] sm:%s412] %v429
                  %v431 = vld [vmem:[%s419 + $0x3c] sm:%s412]
                  %432 = vst [vmem:[%s420 + $0x14] sm:%s412] %v431
                  %v433 = vld [vmem:[%s419 + $0x48] sm:%s412]
                  %434 = vst [vmem:[%s420 + $0x18] sm:%s412] %v433
                  %v435 = vld [vmem:[%s419 + $0x54] sm:%s412]
                  %436 = vst [vmem:[%s420 + $0x1c] sm:%s412] %v435
                $region91: #{tpu_custom_call.1} parent=78 // loop_footer
                  %s418 = sadd.s32 1, %s414
                $region92: #{tpu_custom_call.1} parent=78 // loop_footer_branch
                  %413 = sbr.rel target = $region88
                $region93: #{tpu_custom_call.1} parent=78 // loop_exit
                  _
              $region79: #{tpu_custom_call.1} parent=63 // pred_fallthru
                _
            $region64: #{tpu_custom_call.1} parent=59 // pred_fallthru
              _
            // Predicated region
            $region65: #{tpu_custom_call.1} parent=59 // pred_check
              _
            $region66: #{tpu_custom_call.1} parent=59 // pred_check_branch
              %374 = sbr.rel (0) target = $region68
            $region67: #{tpu_custom_call.1} parent=59 // pred_region
              %s376 = ssub.s32 16, 1
              loop: start=0, step=1, limit=1
              $region69: #{tpu_custom_call.1} parent=67 // loop_pre_header
                _
              $region70: #{tpu_custom_call.1} parent=67 // loop_header
                %s378 = sphi 0, %s382
                %p379 = scmp.ge.s32.totalorder %s378, 1
                %s383 = sphi %s368, %s368
                %s384 = sphi %s365, %s365
              $region71: #{tpu_custom_call.1} parent=67 // loop_header_branch
                %381 = sbr.rel (%p379) target = $region75
              $region72: #{tpu_custom_call.1} parent=67 // loop_body
                %v385 = vld [vmem:[%s383] sm:%s376]
                %386 = vst [vmem:[%s384] sm:%s376] %v385
                %v387 = vld [vmem:[%s383 + $0xc] sm:%s376]
                %388 = vst [vmem:[%s384 + $0x4] sm:%s376] %v387
                %v389 = vld [vmem:[%s383 + $0x18] sm:%s376]
                %390 = vst [vmem:[%s384 + $0x8] sm:%s376] %v389
                %v391 = vld [vmem:[%s383 + $0x24] sm:%s376]
                %392 = vst [vmem:[%s384 + $0xc] sm:%s376] %v391
                %v393 = vld [vmem:[%s383 + $0x30] sm:%s376]
                %394 = vst [vmem:[%s384 + $0x10] sm:%s376] %v393
                %v395 = vld [vmem:[%s383 + $0x3c] sm:%s376]
                %396 = vst [vmem:[%s384 + $0x14] sm:%s376] %v395
                %v397 = vld [vmem:[%s383 + $0x48] sm:%s376]
                %398 = vst [vmem:[%s384 + $0x18] sm:%s376] %v397
                %v399 = vld [vmem:[%s383 + $0x54] sm:%s376]
                %400 = vst [vmem:[%s384 + $0x1c] sm:%s376] %v399
              $region73: #{tpu_custom_call.1} parent=67 // loop_footer
                %s382 = sadd.s32 1, %s378
              $region74: #{tpu_custom_call.1} parent=67 // loop_footer_branch
                %377 = sbr.rel target = $region70
              $region75: #{tpu_custom_call.1} parent=67 // loop_exit
                _
            $region68: #{tpu_custom_call.1} parent=59 // pred_fallthru
              _
          $region60: #{tpu_custom_call.1} parent=55 // pred_fallthru
            _
          %437 = vnop
        $region56: #{tpu_custom_call.1} parent=47 // pred_fallthru
          _
        // Predicated region
        $region94: #{tpu_custom_call.1} parent=47 // pred_check
          %p438 = pneg %p233
        $region95: #{tpu_custom_call.1} parent=47 // pred_check_branch
          %440 = sbr.rel (%p438) target = $region97
        $region96: #{tpu_custom_call.1} parent=47 // pred_region
          %p441 = scmp.lt.s32.totalorder %s26, 2
          %s442 = scalar_select %p441, %s26, 2
          %p443 = scmp.lt.s32.totalorder %s27, 0
          %s444 = scalar_select %p443, %s27, 0
          %s445 = sadd.s32 %s444, %s442
          %s446 = smul.addr %s445, 8
          %s447 = scalar_lea.vmem %s8, %s446
        $region97: #{tpu_custom_call.1} parent=47 // pred_fallthru
          _
      $region48: #{tpu_custom_call.1} parent=5 // pred_fallthru
        _
      %p448 = scmp.le.s32.totalorder 1, %s19
      %p449 = scmp.lt.s32.totalorder %s19, 4
      %p450 = pnand %p448, %p449
      %p451 = pneg %p450
      // Predicated region
      $region98: #{tpu_custom_call.1} parent=5 // pred_check
        _
      $region99: #{tpu_custom_call.1} parent=5 // pred_check_branch
        %453 = sbr.rel (%p450) target = $region101
      $region100: #{tpu_custom_call.1} parent=5 // pred_region
        %s454 = ssub.s32 %s19, 1
        %s455 = sand.u32 %s198, 1
        %s456 = sand.u32 %s198, 1
        %s457 = smul.addr %s456, 32
        %s458 = scalar_lea.vmem [#allocation6], %s457
        // Predicated region
        $region102: #{tpu_custom_call.1} parent=100 // pred_check
          %p459 = pneg %p211
        $region103: #{tpu_custom_call.1} parent=100 // pred_check_branch
          %461 = sbr.rel (%p459) target = $region105
        $region104: #{tpu_custom_call.1} parent=100 // pred_region
          _
        $region105: #{tpu_custom_call.1} parent=100 // pred_fallthru
          _
        %p462 = scmp.lt.s32.totalorder %s28, 2
        %s463 = scalar_select %p462, %s28, 2
        %s464 = smul.addr %s463, 8
        %s465 = scalar_lea.vmem %s0, %s464
        %p466 = pneg %p57
        %p467 = pneg %p54
        %p468 = pneg %p78
        %p469 = pneg %p75
        %p470 = pneg %p99
        %p471 = pneg %p96
        %p472 = pneg %p120
        %p473 = pneg %p117
        %p474 = pneg %p141
        %p475 = pneg %p138
        %p476 = pneg %p162
        %p477 = pneg %p159
        %p478 = pneg %p183
        %p479 = pneg %p180
        %s480 = sand.u32 %s198, 1
        %s481 = sand.u32 %s198, 1
        %s482 = smul.addr %s481, 32
        %s483 = scalar_lea.vmem [#allocation6], %s482
        %p484 = pneg %p211
        %p485 = pneg %p208
        %p486 = scmp.lt.s32.totalorder %s28, 2
        %s487 = scalar_select %p486, %s28, 2
        %p488 = scmp.lt.s32.totalorder %s29, 0
        %s489 = scalar_select %p488, %s29, 0
        %s490 = sadd.s32 %s489, %s487
        %s491 = smul.addr %s490, 8
        %s492 = scalar_lea.vmem %s8, %s491
        %p493 = pneg %p239
        %p494 = pneg %p236
        %p495 = pneg %p260
        %p496 = pneg %p257
        %p497 = pneg %p281
        %p498 = pneg %p278
        %p499 = pneg %p309
        %p500 = pneg %p306
        %p501 = scmp.lt.s32.totalorder %s28, 2
        %s502 = scalar_select %p501, %s28, 2
        %p503 = scmp.lt.s32.totalorder %s29, 0
        %s504 = scalar_select %p503, %s29, 0
        %s505 = sadd.s32 %s504, %s502
        %s506 = smul.addr %s505, 8
        %s507 = scalar_lea.vmem %s11, %s506
        %p508 = scmp.lt.s32.totalorder %s28, 2
        %s509 = scalar_select %p508, %s28, 2
        %s510 = smul.addr %s509, 8
        %s511 = scalar_lea.vmem %s0, %s510
        %p512 = scmp.lt.s32.totalorder %s28, 2
        %s513 = scalar_select %p512, %s28, 2
        %p514 = scmp.lt.s32.totalorder %s29, 0
        %s515 = scalar_select %p514, %s29, 0
        %s516 = sadd.s32 %s515, %s513
        %s517 = smul.addr %s516, 8
        %s518 = scalar_lea.vmem %s8, %s517
        %p519 = scmp.lt.s32.totalorder %s28, 2
        %s520 = scalar_select %p519, %s28, 2
        %p521 = scmp.lt.s32.totalorder %s29, 0
        %s522 = scalar_select %p521, %s29, 0
        %s523 = sadd.s32 %s522, %s520
        %s524 = smul.addr %s523, 8
        %s525 = scalar_lea.vmem %s11, %s524
        %p526 = scmp.eq.s32.totalorder %s29, 0
        // Predicated region
        $region106: #{tpu_custom_call.1} parent=100 // pred_check
          %p527 = pneg %p526
        $region107: #{tpu_custom_call.1} parent=100 // pred_check_branch
          %529 = sbr.rel (%p527) target = $region109
        $region108: #{tpu_custom_call.1} parent=100 // pred_region
          %v530 = vld [vmem:[%s511] sm:$0xff]
          %v531 = vld [vmem:[%s1] sm:$0xf]
          %v532 = vld [vmem:[%s2] sm:$0x1]
          %v534 = vlaneseq
          %v535 = vshrl.u32 %v534, 7
          %v536 = vsub.s32 0, %v535
          %v537 = vrot.slane %v532, %v536
          %vm539 = vcmask 31744
          %v541 = vsel %vm539, %v530, 0
          %vm543 = vcmask 1043456
          %v545 = vsel %vm543, %v531, 0
          %547 = vmatprep.subr.mxu0 0.0
          %548 = vmatpush1.msra.mxu0 0.0
          %549 = vmatprep.subr.mxu0 0.0
          %550 = vmatpush1.msra.mxu0 0.0
          %551 = vmatprep.subr.mxu0 0.0
          %552 = vmatpush1.msra.mxu0 0.0
          %553 = vmatprep.subr.mxu0 0.0
          %554 = vmatpush1.msra.mxu0 0.0
          %555 = vmatprep.subr.mxu0 0.0
          %556 = vmatpush1.msra.mxu0 0.0
          %557 = vmatprep.subr.mxu0 0.0
          %558 = vmatpush1.msra.mxu0 0.0
          %559 = vmatprep.subr.mxu0 0.0
          %560 = vmatpush1.msra.mxu0 0.0
          %561 = vmatprep.subr.mxu0 0.0
          %562 = vmatpush1.msra.mxu0 0.0
          %563 = vmatprep.subr.mxu0 0.0
          %564 = vmatpush1.msra.mxu0 0.0
          %565 = vmatprep.subr.mxu0 0.0
          %566 = vmatpush1.msra.mxu0 0.0
          %567 = vmatprep.subr.mxu0 0.0
          %568 = vmatpush1.msra.mxu0 0.0
          %569 = vmatprep.subr.mxu0 0.0
          %570 = vmatpush1.msra.mxu0 0.0
          %571 = vmatprep.subr.mxu0 0.0
          %572 = vmatpush1.msra.mxu0 0.0
          %573 = vmatprep.subr.mxu0 0.0
          %574 = vmatpush1.msra.mxu0 0.0
          %575 = vmatprep.subr.mxu0 0.0
          %576 = vmatpush1.msra.mxu0 0.0
          %577 = vmatprep.subr.mxu0 0.0
          %578 = vmatpush1.msra.mxu0 %v545
          %579 = vmatprep.subr.mxu0 0.0
          %580 = vmatpush2.msra.mxu0 0.0
          %581 = vmatprep.subr.mxu0 0.0
          %582 = vmatpush2.msra.mxu0 0.0
          %583 = vmatprep.subr.mxu0 0.0
          %584 = vmatpush2.msra.mxu0 0.0
          %585 = vmatprep.subr.mxu0 0.0
          %586 = vmatpush2.msra.mxu0 0.0
          %587 = vmatprep.subr.mxu0 0.0
          %588 = vmatpush2.msra.mxu0 0.0
          %589 = vmatprep.subr.mxu0 0.0
          %590 = vmatpush2.msra.mxu0 0.0
          %591 = vmatprep.subr.mxu0 0.0
          %592 = vmatpush2.msra.mxu0 0.0
          %593 = vmatprep.subr.mxu0 0.0
          %594 = vmatpush2.msra.mxu0 0.0
          %595 = vmatprep.subr.mxu0 0.0
          %596 = vmatpush2.msra.mxu0 0.0
          %597 = vmatprep.subr.mxu0 0.0
          %598 = vmatpush2.msra.mxu0 0.0
          %599 = vmatprep.subr.mxu0 0.0
          %600 = vmatpush2.msra.mxu0 0.0
          %601 = vmatprep.subr.mxu0 0.0
          %602 = vmatpush2.msra.mxu0 0.0
          %603 = vmatprep.subr.mxu0 0.0
          %604 = vmatpush2.msra.mxu0 0.0
          %605 = vmatprep.subr.mxu0 0.0
          %606 = vmatpush2.msra.mxu0 0.0
          %607 = vmatprep.subr.mxu0 0.0
          %608 = vmatpush2.msra.mxu0 0.0
          %609 = vmatprep.subr.mxu0 0.0
          %610 = vmatpush2.msra.mxu0 0.0
          %611 = vmatprep.mubr.f32.mxu0 0.0
          %612 = vmatmul.mubr.f32.gmra.mxu0 %v541
          %v613 = vpop.f32.mrf.mxu0
          %v614 = vadd.f32 %v537, %v613
          %v615 = vpop.f32.mrf.mxu0
          %616 = vdwg.mxu0
          %v617 = vmax.f32 %v614, 0.0
          %v618 = vld [vmem:[%s3] sm:$0xff]
          %v619 = vld [vmem:[%s3 + $0x8] sm:$0xff]
          %v620 = vld [vmem:[%s3 + $0x10] sm:$0xff]
          %v621 = vld [vmem:[%s3 + $0x18] sm:$0xff]
          %v622 = vld [vmem:[%s4] sm:$0x1]
          %v624 = vlaneseq
          %v625 = vshrl.u32 %v624, 7
          %v626 = vsub.s32 0, %v625
          %v627 = vrot.slane %v622, %v626
          %vm629 = vcmask 261120
          %v631 = vsel %vm629, %v617, 0
          %633 = vmatprep.subr.mxu0 0.0
          %634 = vmatpush1.msra.mxu0 0.0
          %635 = vmatprep.subr.mxu0 0.0
          %636 = vmatpush1.msra.mxu0 0.0
          %637 = vmatprep.subr.mxu0 0.0
          %638 = vmatpush1.msra.mxu0 0.0
          %639 = vmatprep.subr.mxu0 0.0
          %640 = vmatpush1.msra.mxu0 0.0
          %641 = vmatprep.subr.mxu0 0.0
          %642 = vmatpush1.msra.mxu0 0.0
          %643 = vmatprep.subr.mxu0 0.0
          %644 = vmatpush1.msra.mxu0 0.0
          %645 = vmatprep.subr.mxu0 0.0
          %646 = vmatpush1.msra.mxu0 0.0
          %647 = vmatprep.subr.mxu0 0.0
          %648 = vmatpush1.msra.mxu0 0.0
          %649 = vmatprep.subr.mxu0 0.0
          %650 = vmatpush1.msra.mxu0 0.0
          %651 = vmatprep.subr.mxu0 0.0
          %652 = vmatpush1.msra.mxu0 0.0
          %653 = vmatprep.subr.mxu0 0.0
          %654 = vmatpush1.msra.mxu0 0.0
          %655 = vmatprep.subr.mxu0 0.0
          %656 = vmatpush1.msra.mxu0 0.0
          %657 = vmatprep.subr.mxu0 0.0
          %658 = vmatpush1.msra.mxu0 %v621
          %659 = vmatprep.subr.mxu0 0.0
          %660 = vmatpush1.msra.mxu0 %v620
          %661 = vmatprep.subr.mxu0 0.0
          %662 = vmatpush1.msra.mxu0 %v619
          %663 = vmatprep.subr.mxu0 0.0
          %664 = vmatpush1.msra.mxu0 %v618
          %665 = vmatprep.subr.mxu0 0.0
          %666 = vmatpush2.msra.mxu0 0.0
          %667 = vmatprep.subr.mxu0 0.0
          %668 = vmatpush2.msra.mxu0 0.0
          %669 = vmatprep.subr.mxu0 0.0
          %670 = vmatpush2.msra.mxu0 0.0
          %671 = vmatprep.subr.mxu0 0.0
          %672 = vmatpush2.msra.mxu0 0.0
          %673 = vmatprep.subr.mxu0 0.0
          %674 = vmatpush2.msra.mxu0 0.0
          %675 = vmatprep.subr.mxu0 0.0
          %676 = vmatpush2.msra.mxu0 0.0
          %677 = vmatprep.subr.mxu0 0.0
          %678 = vmatpush2.msra.mxu0 0.0
          %679 = vmatprep.subr.mxu0 0.0
          %680 = vmatpush2.msra.mxu0 0.0
          %681 = vmatprep.subr.mxu0 0.0
          %682 = vmatpush2.msra.mxu0 0.0
          %683 = vmatprep.subr.mxu0 0.0
          %684 = vmatpush2.msra.mxu0 0.0
          %685 = vmatprep.subr.mxu0 0.0
          %686 = vmatpush2.msra.mxu0 0.0
          %687 = vmatprep.subr.mxu0 0.0
          %688 = vmatpush2.msra.mxu0 0.0
          %689 = vmatprep.subr.mxu0 0.0
          %690 = vmatpush2.msra.mxu0 0.0
          %691 = vmatprep.subr.mxu0 0.0
          %692 = vmatpush2.msra.mxu0 0.0
          %693 = vmatprep.subr.mxu0 0.0
          %694 = vmatpush2.msra.mxu0 0.0
          %695 = vmatprep.subr.mxu0 0.0
          %696 = vmatpush2.msra.mxu0 0.0
          %697 = vmatprep.mubr.f32.mxu0 0.0
          %698 = vmatmul.mubr.f32.gmra.mxu0 %v631
          %v699 = vpop.f32.mrf.mxu0
          %v700 = vadd.f32 %v627, %v699
          %v701 = vpop.f32.mrf.mxu0
          %702 = vdwg.mxu0
          %v703 = vmax.f32 %v700, 0.0
          %v704 = vld [vmem:[%s5] sm:$0xff]
          %v705 = vld [vmem:[%s5 + $0x8] sm:$0xff]
          %v706 = vld [vmem:[%s5 + $0x10] sm:$0xff]
          %v707 = vld [vmem:[%s5 + $0x18] sm:$0xff]
          %v708 = vld [vmem:[%s6] sm:$0x1]
          %v710 = vlaneseq
          %v711 = vshrl.u32 %v710, 7
          %v712 = vsub.s32 0, %v711
          %v713 = vrot.slane %v708, %v712
          %v716 = vsel %vm629, %v703, 0
          %718 = vmatprep.subr.mxu0 0.0
          %719 = vmatpush1.msra.mxu0 0.0
          %720 = vmatprep.subr.mxu0 0.0
          %721 = vmatpush1.msra.mxu0 0.0
          %722 = vmatprep.subr.mxu0 0.0
          %723 = vmatpush1.msra.mxu0 0.0
          %724 = vmatprep.subr.mxu0 0.0
          %725 = vmatpush1.msra.mxu0 0.0
          %726 = vmatprep.subr.mxu0 0.0
          %727 = vmatpush1.msra.mxu0 0.0
          %728 = vmatprep.subr.mxu0 0.0
          %729 = vmatpush1.msra.mxu0 0.0
          %730 = vmatprep.subr.mxu0 0.0
          %731 = vmatpush1.msra.mxu0 0.0
          %732 = vmatprep.subr.mxu0 0.0
          %733 = vmatpush1.msra.mxu0 0.0
          %734 = vmatprep.subr.mxu0 0.0
          %735 = vmatpush1.msra.mxu0 0.0
          %736 = vmatprep.subr.mxu0 0.0
          %737 = vmatpush1.msra.mxu0 0.0
          %738 = vmatprep.subr.mxu0 0.0
          %739 = vmatpush1.msra.mxu0 0.0
          %740 = vmatprep.subr.mxu0 0.0
          %741 = vmatpush1.msra.mxu0 0.0
          %742 = vmatprep.subr.mxu0 0.0
          %743 = vmatpush1.msra.mxu0 %v707
          %744 = vmatprep.subr.mxu0 0.0
          %745 = vmatpush1.msra.mxu0 %v706
          %746 = vmatprep.subr.mxu0 0.0
          %747 = vmatpush1.msra.mxu0 %v705
          %748 = vmatprep.subr.mxu0 0.0
          %749 = vmatpush1.msra.mxu0 %v704
          %750 = vmatprep.subr.mxu0 0.0
          %751 = vmatpush2.msra.mxu0 0.0
          %752 = vmatprep.subr.mxu0 0.0
          %753 = vmatpush2.msra.mxu0 0.0
          %754 = vmatprep.subr.mxu0 0.0
          %755 = vmatpush2.msra.mxu0 0.0
          %756 = vmatprep.subr.mxu0 0.0
          %757 = vmatpush2.msra.mxu0 0.0
          %758 = vmatprep.subr.mxu0 0.0
          %759 = vmatpush2.msra.mxu0 0.0
          %760 = vmatprep.subr.mxu0 0.0
          %761 = vmatpush2.msra.mxu0 0.0
          %762 = vmatprep.subr.mxu0 0.0
          %763 = vmatpush2.msra.mxu0 0.0
          %764 = vmatprep.subr.mxu0 0.0
          %765 = vmatpush2.msra.mxu0 0.0
          %766 = vmatprep.subr.mxu0 0.0
          %767 = vmatpush2.msra.mxu0 0.0
          %768 = vmatprep.subr.mxu0 0.0
          %769 = vmatpush2.msra.mxu0 0.0
          %770 = vmatprep.subr.mxu0 0.0
          %771 = vmatpush2.msra.mxu0 0.0
          %772 = vmatprep.subr.mxu0 0.0
          %773 = vmatpush2.msra.mxu0 0.0
          %774 = vmatprep.subr.mxu0 0.0
          %775 = vmatpush2.msra.mxu0 0.0
          %776 = vmatprep.subr.mxu0 0.0
          %777 = vmatpush2.msra.mxu0 0.0
          %778 = vmatprep.subr.mxu0 0.0
          %779 = vmatpush2.msra.mxu0 0.0
          %780 = vmatprep.subr.mxu0 0.0
          %781 = vmatpush2.msra.mxu0 0.0
          %782 = vmatprep.mubr.f32.mxu0 0.0
          %783 = vmatmul.mubr.f32.gmra.mxu0 %v716
          %v784 = vpop.f32.mrf.mxu0
          %v785 = vadd.f32 %v713, %v784
          %v786 = vpop.f32.mrf.mxu0
          %787 = vdwg.mxu0
          %vm788 = vcmask 64512
          %789 = vst.msk [vmem:[#allocation2] sm:$0xff] %vm788, %v785
          %vm790 = vcmask 7168
          %791 = vst.msk [vmem:[#allocation3] sm:$0xff] %vm790, 0.0
        $region109: #{tpu_custom_call.1} parent=100 // pred_fallthru
          _
        %v792 = vld [vmem:[#allocation2] sm:$0xff]
        %s793 = sld [smem:[#allocation4]]
        %v794 = vstv %s793
        %v795 = vld [vmem:[%s458] sm:$0xf]
        %v796 = vunpack.c.l.bf16 %v795
        %798 = vset.pattern.permute.xlu0 0
        %799 = vperm.xlu0 %798, %v792
        %v800 = vpop.permute.xlu0 %799
        %v802 = vmul.f32 %v796, %v800
        %v803 = vadd.f32 %v794, %v802
        %s804 = scalar_lea.vmem %s458, 4 [#allocation6]
        %v805 = vld [vmem:[%s804] sm:$0xf]
        %v806 = vunpack.c.l.bf16 %v805
        %807 = vset.pattern.permute.xlu0 1
        %808 = vperm.xlu0 %807, %v792
        %v809 = vpop.permute.xlu0 %808
        %v811 = vmul.f32 %v806, %v809
        %v812 = vadd.f32 %v803, %v811
        %s813 = scalar_lea.vmem %s458, 8 [#allocation6]
        %v814 = vld [vmem:[%s813] sm:$0xf]
        %v815 = vunpack.c.l.bf16 %v814
        %816 = vset.pattern.permute.xlu0 2
        %817 = vperm.xlu0 %816, %v792
        %v818 = vpop.permute.xlu0 %817
        %v820 = vmul.f32 %v815, %v818
        %v821 = vadd.f32 %v812, %v820
        %s822 = scalar_lea.vmem %s458, 12 [#allocation6]
        %v823 = vld [vmem:[%s822] sm:$0xf]
        %v824 = vunpack.c.l.bf16 %v823
        %825 = vset.pattern.permute.xlu0 3
        %826 = vperm.xlu0 %825, %v792
        %v827 = vpop.permute.xlu0 %826
        %v829 = vmul.f32 %v824, %v827
        %v830 = vadd.f32 %v821, %v829
        %s831 = scalar_lea.vmem %s458, 16 [#allocation6]
        %v832 = vld [vmem:[%s831] sm:$0xf]
        %v833 = vunpack.c.l.bf16 %v832
        %834 = vset.pattern.permute.xlu0 4
        %835 = vperm.xlu0 %834, %v792
        %v836 = vpop.permute.xlu0 %835
        %v838 = vmul.f32 %v833, %v836
        %v839 = vadd.f32 %v830, %v838
        %s840 = scalar_lea.vmem %s458, 20 [#allocation6]
        %v841 = vld [vmem:[%s840] sm:$0xf]
        %v842 = vunpack.c.l.bf16 %v841
        %843 = vset.pattern.permute.xlu0 5
        %844 = vperm.xlu0 %843, %v792
        %v845 = vpop.permute.xlu0 %844
        %v847 = vmul.f32 %v842, %v845
        %v848 = vadd.f32 %v839, %v847
        %s849 = scalar_lea.vmem %s458, 24 [#allocation6]
        %v850 = vld [vmem:[%s849] sm:$0xf]
        %v851 = vunpack.c.l.bf16 %v850
        %852 = vset.pattern.permute.xlu0 6
        %853 = vperm.xlu0 %852, %v792
        %v854 = vpop.permute.xlu0 %853
        %v856 = vmul.f32 %v851, %v854
        %v857 = vadd.f32 %v848, %v856
        %s858 = scalar_lea.vmem %s458, 28 [#allocation6]
        %v859 = vld [vmem:[%s858] sm:$0xf]
        %v860 = vunpack.c.l.bf16 %v859
        %861 = vset.pattern.permute.xlu0 7
        %862 = vperm.xlu0 %861, %v792
        %v863 = vpop.permute.xlu0 %862
        %v865 = vmul.f32 %v860, %v863
        %v866 = vadd.f32 %v857, %v865
        %v867 = vld [vmem:[%s518] sm:$0xff]
        %v868 = vsub.f32 %v867, %v866
        %v869 = vlaneseq
        %v870 = vshrl.u32 %v869, 7
        %v871 = vadd.s32 %v870, 8
        %v872 = vlaneseq
        %v873 = vand.u32 %v872, 127
        %v874 = vadd.s32 %v870, 1
        %v875 = vadd.s32 %v871, 1
        %vm876 = vcmp.eq.s32.totalorder %v874, %v873
        %vm877 = vcmp.eq.s32.totalorder %v875, %v873
        %v878 = vsel %vm876, 1, 0
        %v879 = vsel %vm877, 1, 0
        %v880 = vcvt.s32.f32 %v878
        %v881 = vcvt.s32.f32 %v879
        %vm882 = vcmask 130048
        %v884 = vsel %vm882, %v868, 0
        %886 = vmatprep.subr.mxu0 0.0
        %887 = vmatpush1.msra.mxu0 0.0
        %888 = vmatprep.subr.mxu0 0.0
        %889 = vmatpush1.msra.mxu0 0.0
        %890 = vmatprep.subr.mxu0 0.0
        %891 = vmatpush1.msra.mxu0 0.0
        %892 = vmatprep.subr.mxu0 0.0
        %893 = vmatpush1.msra.mxu0 0.0
        %894 = vmatprep.subr.mxu0 0.0
        %895 = vmatpush1.msra.mxu0 0.0
        %896 = vmatprep.subr.mxu0 0.0
        %897 = vmatpush1.msra.mxu0 0.0
        %898 = vmatprep.subr.mxu0 0.0
        %899 = vmatpush1.msra.mxu0 0.0
        %900 = vmatprep.subr.mxu0 0.0
        %901 = vmatpush1.msra.mxu0 0.0
        %902 = vmatprep.subr.mxu0 0.0
        %903 = vmatpush1.msra.mxu0 0.0
        %904 = vmatprep.subr.mxu0 0.0
        %905 = vmatpush1.msra.mxu0 0.0
        %906 = vmatprep.subr.mxu0 0.0
        %907 = vmatpush1.msra.mxu0 0.0
        %908 = vmatprep.subr.mxu0 0.0
        %909 = vmatpush1.msra.mxu0 0.0
        %910 = vmatprep.subr.mxu0 0.0
        %911 = vmatpush1.msra.mxu0 0.0
        %912 = vmatprep.subr.mxu0 0.0
        %913 = vmatpush1.msra.mxu0 0.0
        %914 = vmatprep.subr.mxu0 0.0
        %v915 = vand.u32 %v881, 4294901760
        %916 = vmatpush1.msra.mxu0 %v915
        %917 = vmatprep.subr.mxu0 0.0
        %v918 = vand.u32 %v880, 4294901760
        %919 = vmatpush1.msra.mxu0 %v918
        %920 = vmatprep.subr.mxu0 0.0
        %921 = vmatpush2.msra.mxu0 0.0
        %922 = vmatprep.subr.mxu0 0.0
        %923 = vmatpush2.msra.mxu0 0.0
        %924 = vmatprep.subr.mxu0 0.0
        %925 = vmatpush2.msra.mxu0 0.0
        %926 = vmatprep.subr.mxu0 0.0
        %927 = vmatpush2.msra.mxu0 0.0
        %928 = vmatprep.subr.mxu0 0.0
        %929 = vmatpush2.msra.mxu0 0.0
        %930 = vmatprep.subr.mxu0 0.0
        %931 = vmatpush2.msra.mxu0 0.0
        %932 = vmatprep.subr.mxu0 0.0
        %933 = vmatpush2.msra.mxu0 0.0
        %934 = vmatprep.subr.mxu0 0.0
        %935 = vmatpush2.msra.mxu0 0.0
        %936 = vmatprep.subr.mxu0 0.0
        %937 = vmatpush2.msra.mxu0 0.0
        %938 = vmatprep.subr.mxu0 0.0
        %939 = vmatpush2.msra.mxu0 0.0
        %940 = vmatprep.subr.mxu0 0.0
        %941 = vmatpush2.msra.mxu0 0.0
        %942 = vmatprep.subr.mxu0 0.0
        %943 = vmatpush2.msra.mxu0 0.0
        %944 = vmatprep.subr.mxu0 0.0
        %945 = vmatpush2.msra.mxu0 0.0
        %946 = vmatprep.subr.mxu0 0.0
        %947 = vmatpush2.msra.mxu0 0.0
        %948 = vmatprep.subr.mxu0 0.0
        %949 = vmatpush2.msra.mxu0 0.0
        %950 = vmatprep.subr.mxu0 0.0
        %951 = vmatpush2.msra.mxu0 0.0
        %952 = vmatprep.mubr.f32.mxu0 0.0
        %v953 = vand.u32 %v884, 4294901760
        %v954 = vsub.f32 %v884, %v953
        %v955 = vand.u32 %v954, 4294901760
        %v956 = vsub.f32 %v954, %v955
        %v957 = vand.u32 %v956, 4294901760
        %958 = vmatmul.mubr.f32.gmra.mxu0 %v957
        %v959 = vpop.f32.mrf.mxu0
        %v960 = vadd.f32 0.0, %v959
        %v961 = vpop.f32.mrf.mxu0
        %962 = vdwg.mxu0
        %963 = vmatprep.subr.mxu0 0.0
        %964 = vmatpush1.msra.mxu0 0.0
        %965 = vmatprep.subr.mxu0 0.0
        %966 = vmatpush1.msra.mxu0 0.0
        %967 = vmatprep.subr.mxu0 0.0
        %968 = vmatpush1.msra.mxu0 0.0
        %969 = vmatprep.subr.mxu0 0.0
        %970 = vmatpush1.msra.mxu0 0.0
        %971 = vmatprep.subr.mxu0 0.0
        %972 = vmatpush1.msra.mxu0 0.0
        %973 = vmatprep.subr.mxu0 0.0
        %974 = vmatpush1.msra.mxu0 0.0
        %975 = vmatprep.subr.mxu0 0.0
        %976 = vmatpush1.msra.mxu0 0.0
        %977 = vmatprep.subr.mxu0 0.0
        %978 = vmatpush1.msra.mxu0 0.0
        %979 = vmatprep.subr.mxu0 0.0
        %980 = vmatpush1.msra.mxu0 0.0
        %981 = vmatprep.subr.mxu0 0.0
        %982 = vmatpush1.msra.mxu0 0.0
        %983 = vmatprep.subr.mxu0 0.0
        %984 = vmatpush1.msra.mxu0 0.0
        %985 = vmatprep.subr.mxu0 0.0
        %986 = vmatpush1.msra.mxu0 0.0
        %987 = vmatprep.subr.mxu0 0.0
        %988 = vmatpush1.msra.mxu0 0.0
        %989 = vmatprep.subr.mxu0 0.0
        %990 = vmatpush1.msra.mxu0 0.0
        %991 = vmatprep.subr.mxu0 0.0
        %v992 = vand.u32 %v881, 4294901760
        %v993 = vsub.f32 %v881, %v992
        %v994 = vand.u32 %v993, 4294901760
        %v995 = vsub.f32 %v993, %v994
        %v996 = vand.u32 %v995, 4294901760
        %997 = vmatpush1.msra.mxu0 %v996
        %998 = vmatprep.subr.mxu0 0.0
        %v999 = vand.u32 %v880, 4294901760
        %v1000 = vsub.f32 %v880, %v999
        %v1001 = vand.u32 %v1000, 4294901760
        %v1002 = vsub.f32 %v1000, %v1001
        %v1003 = vand.u32 %v1002, 4294901760
        %1004 = vmatpush1.msra.mxu0 %v1003
        %1005 = vmatprep.subr.mxu0 0.0
        %1006 = vmatpush2.msra.mxu0 0.0
        %1007 = vmatprep.subr.mxu0 0.0
        %1008 = vmatpush2.msra.mxu0 0.0
        %1009 = vmatprep.subr.mxu0 0.0
        %1010 = vmatpush2.msra.mxu0 0.0
        %1011 = vmatprep.subr.mxu0 0.0
        %1012 = vmatpush2.msra.mxu0 0.0
        %1013 = vmatprep.subr.mxu0 0.0
        %1014 = vmatpush2.msra.mxu0 0.0
        %1015 = vmatprep.subr.mxu0 0.0
        %1016 = vmatpush2.msra.mxu0 0.0
        %1017 = vmatprep.subr.mxu0 0.0
        %1018 = vmatpush2.msra.mxu0 0.0
        %1019 = vmatprep.subr.mxu0 0.0
        %1020 = vmatpush2.msra.mxu0 0.0
        %1021 = vmatprep.subr.mxu0 0.0
        %1022 = vmatpush2.msra.mxu0 0.0
        %1023 = vmatprep.subr.mxu0 0.0
        %1024 = vmatpush2.msra.mxu0 0.0
        %1025 = vmatprep.subr.mxu0 0.0
        %1026 = vmatpush2.msra.mxu0 0.0
        %1027 = vmatprep.subr.mxu0 0.0
        %1028 = vmatpush2.msra.mxu0 0.0
        %1029 = vmatprep.subr.mxu0 0.0
        %1030 = vmatpush2.msra.mxu0 0.0
        %1031 = vmatprep.subr.mxu0 0.0
        %1032 = vmatpush2.msra.mxu0 0.0
        %1033 = vmatprep.subr.mxu0 0.0
        %1034 = vmatpush2.msra.mxu0 0.0
        %1035 = vmatprep.subr.mxu0 0.0
        %1036 = vmatpush2.msra.mxu0 0.0
        %1037 = vmatprep.mubr.f32.mxu0 0.0
        %v1038 = vand.u32 %v884, 4294901760
        %1039 = vmatmul.mubr.f32.gmra.mxu0 %v1038
        %v1040 = vpop.f32.mrf.mxu0
        %v1041 = vadd.f32 %v960, %v1040
        %v1042 = vpop.f32.mrf.mxu0
        %1043 = vdwg.mxu0
        %1044 = vmatprep.subr.mxu0 0.0
        %1045 = vmatpush1.msra.mxu0 0.0
        %1046 = vmatprep.subr.mxu0 0.0
        %1047 = vmatpush1.msra.mxu0 0.0
        %1048 = vmatprep.subr.mxu0 0.0
        %1049 = vmatpush1.msra.mxu0 0.0
        %1050 = vmatprep.subr.mxu0 0.0
        %1051 = vmatpush1.msra.mxu0 0.0
        %1052 = vmatprep.subr.mxu0 0.0
        %1053 = vmatpush1.msra.mxu0 0.0
        %1054 = vmatprep.subr.mxu0 0.0
        %1055 = vmatpush1.msra.mxu0 0.0
        %1056 = vmatprep.subr.mxu0 0.0
        %1057 = vmatpush1.msra.mxu0 0.0
        %1058 = vmatprep.subr.mxu0 0.0
        %1059 = vmatpush1.msra.mxu0 0.0
        %1060 = vmatprep.subr.mxu0 0.0
        %1061 = vmatpush1.msra.mxu0 0.0
        %1062 = vmatprep.subr.mxu0 0.0
        %1063 = vmatpush1.msra.mxu0 0.0
        %1064 = vmatprep.subr.mxu0 0.0
        %1065 = vmatpush1.msra.mxu0 0.0
        %1066 = vmatprep.subr.mxu0 0.0
        %1067 = vmatpush1.msra.mxu0 0.0
        %1068 = vmatprep.subr.mxu0 0.0
        %1069 = vmatpush1.msra.mxu0 0.0
        %1070 = vmatprep.subr.mxu0 0.0
        %1071 = vmatpush1.msra.mxu0 0.0
        %1072 = vmatprep.subr.mxu0 0.0
        %v1073 = vand.u32 %v881, 4294901760
        %v1074 = vsub.f32 %v881, %v1073
        %1075 = vmatpush1.msra.mxu0 %v1074
        %1076 = vmatprep.subr.mxu0 0.0
        %v1077 = vand.u32 %v880, 4294901760
        %v1078 = vsub.f32 %v880, %v1077
        %1079 = vmatpush1.msra.mxu0 %v1078
        %1080 = vmatprep.subr.mxu0 0.0
        %1081 = vmatpush2.msra.mxu0 0.0
        %1082 = vmatprep.subr.mxu0 0.0
        %1083 = vmatpush2.msra.mxu0 0.0
        %1084 = vmatprep.subr.mxu0 0.0
        %1085 = vmatpush2.msra.mxu0 0.0
        %1086 = vmatprep.subr.mxu0 0.0
        %1087 = vmatpush2.msra.mxu0 0.0
        %1088 = vmatprep.subr.mxu0 0.0
        %1089 = vmatpush2.msra.mxu0 0.0
        %1090 = vmatprep.subr.mxu0 0.0
        %1091 = vmatpush2.msra.mxu0 0.0
        %1092 = vmatprep.subr.mxu0 0.0
        %1093 = vmatpush2.msra.mxu0 0.0
        %1094 = vmatprep.subr.mxu0 0.0
        %1095 = vmatpush2.msra.mxu0 0.0
        %1096 = vmatprep.subr.mxu0 0.0
        %1097 = vmatpush2.msra.mxu0 0.0
        %1098 = vmatprep.subr.mxu0 0.0
        %1099 = vmatpush2.msra.mxu0 0.0
        %1100 = vmatprep.subr.mxu0 0.0
        %1101 = vmatpush2.msra.mxu0 0.0
        %1102 = vmatprep.subr.mxu0 0.0
        %1103 = vmatpush2.msra.mxu0 0.0
        %1104 = vmatprep.subr.mxu0 0.0
        %1105 = vmatpush2.msra.mxu0 0.0
        %1106 = vmatprep.subr.mxu0 0.0
        %1107 = vmatpush2.msra.mxu0 0.0
        %1108 = vmatprep.subr.mxu0 0.0
        %1109 = vmatpush2.msra.mxu0 0.0
        %1110 = vmatprep.subr.mxu0 0.0
        %1111 = vmatpush2.msra.mxu0 0.0
        %1112 = vmatprep.mubr.f32.mxu0 0.0
        %v1113 = vand.u32 %v884, 4294901760
        %v1114 = vsub.f32 %v884, %v1113
        %1115 = vmatmul.mubr.f32.gmra.mxu0 %v1114
        %v1116 = vpop.f32.mrf.mxu0
        %v1117 = vadd.f32 %v1041, %v1116
        %v1118 = vpop.f32.mrf.mxu0
        %1119 = vdwg.mxu0
        %1120 = vmatprep.subr.mxu0 0.0
        %1121 = vmatpush1.msra.mxu0 0.0
        %1122 = vmatprep.subr.mxu0 0.0
        %1123 = vmatpush1.msra.mxu0 0.0
        %1124 = vmatprep.subr.mxu0 0.0
        %1125 = vmatpush1.msra.mxu0 0.0
        %1126 = vmatprep.subr.mxu0 0.0
        %1127 = vmatpush1.msra.mxu0 0.0
        %1128 = vmatprep.subr.mxu0 0.0
        %1129 = vmatpush1.msra.mxu0 0.0
        %1130 = vmatprep.subr.mxu0 0.0
        %1131 = vmatpush1.msra.mxu0 0.0
        %1132 = vmatprep.subr.mxu0 0.0
        %1133 = vmatpush1.msra.mxu0 0.0
        %1134 = vmatprep.subr.mxu0 0.0
        %1135 = vmatpush1.msra.mxu0 0.0
        %1136 = vmatprep.subr.mxu0 0.0
        %1137 = vmatpush1.msra.mxu0 0.0
        %1138 = vmatprep.subr.mxu0 0.0
        %1139 = vmatpush1.msra.mxu0 0.0
        %1140 = vmatprep.subr.mxu0 0.0
        %1141 = vmatpush1.msra.mxu0 0.0
        %1142 = vmatprep.subr.mxu0 0.0
        %1143 = vmatpush1.msra.mxu0 0.0
        %1144 = vmatprep.subr.mxu0 0.0
        %1145 = vmatpush1.msra.mxu0 0.0
        %1146 = vmatprep.subr.mxu0 0.0
        %1147 = vmatpush1.msra.mxu0 0.0
        %1148 = vmatprep.subr.mxu0 0.0
        %v1149 = vand.u32 %v881, 4294901760
        %1150 = vmatpush1.msra.mxu0 %v1149
        %1151 = vmatprep.subr.mxu0 0.0
        %v1152 = vand.u32 %v880, 4294901760
        %1153 = vmatpush1.msra.mxu0 %v1152
        %1154 = vmatprep.subr.mxu0 0.0
        %1155 = vmatpush2.msra.mxu0 0.0
        %1156 = vmatprep.subr.mxu0 0.0
        %1157 = vmatpush2.msra.mxu0 0.0
        %1158 = vmatprep.subr.mxu0 0.0
        %1159 = vmatpush2.msra.mxu0 0.0
        %1160 = vmatprep.subr.mxu0 0.0
        %1161 = vmatpush2.msra.mxu0 0.0
        %1162 = vmatprep.subr.mxu0 0.0
        %1163 = vmatpush2.msra.mxu0 0.0
        %1164 = vmatprep.subr.mxu0 0.0
        %1165 = vmatpush2.msra.mxu0 0.0
        %1166 = vmatprep.subr.mxu0 0.0
        %1167 = vmatpush2.msra.mxu0 0.0
        %1168 = vmatprep.subr.mxu0 0.0
        %1169 = vmatpush2.msra.mxu0 0.0
        %1170 = vmatprep.subr.mxu0 0.0
        %1171 = vmatpush2.msra.mxu0 0.0
        %1172 = vmatprep.subr.mxu0 0.0
        %1173 = vmatpush2.msra.mxu0 0.0
        %1174 = vmatprep.subr.mxu0 0.0
        %1175 = vmatpush2.msra.mxu0 0.0
        %1176 = vmatprep.subr.mxu0 0.0
        %1177 = vmatpush2.msra.mxu0 0.0
        %1178 = vmatprep.subr.mxu0 0.0
        %1179 = vmatpush2.msra.mxu0 0.0
        %1180 = vmatprep.subr.mxu0 0.0
        %1181 = vmatpush2.msra.mxu0 0.0
        %1182 = vmatprep.subr.mxu0 0.0
        %1183 = vmatpush2.msra.mxu0 0.0
        %1184 = vmatprep.subr.mxu0 0.0
        %1185 = vmatpush2.msra.mxu0 0.0
        %1186 = vmatprep.mubr.f32.mxu0 0.0
        %v1187 = vand.u32 %v884, 4294901760
        %v1188 = vsub.f32 %v884, %v1187
        %v1189 = vand.u32 %v1188, 4294901760
        %1190 = vmatmul.mubr.f32.gmra.mxu0 %v1189
        %v1191 = vpop.f32.mrf.mxu0
        %v1192 = vadd.f32 %v1117, %v1191
        %v1193 = vpop.f32.mrf.mxu0
        %1194 = vdwg.mxu0
        %1195 = vmatprep.subr.mxu0 0.0
        %1196 = vmatpush1.msra.mxu0 0.0
        %1197 = vmatprep.subr.mxu0 0.0
        %1198 = vmatpush1.msra.mxu0 0.0
        %1199 = vmatprep.subr.mxu0 0.0
        %1200 = vmatpush1.msra.mxu0 0.0
        %1201 = vmatprep.subr.mxu0 0.0
        %1202 = vmatpush1.msra.mxu0 0.0
        %1203 = vmatprep.subr.mxu0 0.0
        %1204 = vmatpush1.msra.mxu0 0.0
        %1205 = vmatprep.subr.mxu0 0.0
        %1206 = vmatpush1.msra.mxu0 0.0
        %1207 = vmatprep.subr.mxu0 0.0
        %1208 = vmatpush1.msra.mxu0 0.0
        %1209 = vmatprep.subr.mxu0 0.0
        %1210 = vmatpush1.msra.mxu0 0.0
        %1211 = vmatprep.subr.mxu0 0.0
        %1212 = vmatpush1.msra.mxu0 0.0
        %1213 = vmatprep.subr.mxu0 0.0
        %1214 = vmatpush1.msra.mxu0 0.0
        %1215 = vmatprep.subr.mxu0 0.0
        %1216 = vmatpush1.msra.mxu0 0.0
        %1217 = vmatprep.subr.mxu0 0.0
        %1218 = vmatpush1.msra.mxu0 0.0
        %1219 = vmatprep.subr.mxu0 0.0
        %1220 = vmatpush1.msra.mxu0 0.0
        %1221 = vmatprep.subr.mxu0 0.0
        %1222 = vmatpush1.msra.mxu0 0.0
        %1223 = vmatprep.subr.mxu0 0.0
        %v1224 = vand.u32 %v881, 4294901760
        %v1225 = vsub.f32 %v881, %v1224
        %v1226 = vand.u32 %v1225, 4294901760
        %1227 = vmatpush1.msra.mxu0 %v1226
        %1228 = vmatprep.subr.mxu0 0.0
        %v1229 = vand.u32 %v880, 4294901760
        %v1230 = vsub.f32 %v880, %v1229
        %v1231 = vand.u32 %v1230, 4294901760
        %1232 = vmatpush1.msra.mxu0 %v1231
        %1233 = vmatprep.subr.mxu0 0.0
        %1234 = vmatpush2.msra.mxu0 0.0
        %1235 = vmatprep.subr.mxu0 0.0
        %1236 = vmatpush2.msra.mxu0 0.0
        %1237 = vmatprep.subr.mxu0 0.0
        %1238 = vmatpush2.msra.mxu0 0.0
        %1239 = vmatprep.subr.mxu0 0.0
        %1240 = vmatpush2.msra.mxu0 0.0
        %1241 = vmatprep.subr.mxu0 0.0
        %1242 = vmatpush2.msra.mxu0 0.0
        %1243 = vmatprep.subr.mxu0 0.0
        %1244 = vmatpush2.msra.mxu0 0.0
        %1245 = vmatprep.subr.mxu0 0.0
        %1246 = vmatpush2.msra.mxu0 0.0
        %1247 = vmatprep.subr.mxu0 0.0
        %1248 = vmatpush2.msra.mxu0 0.0
        %1249 = vmatprep.subr.mxu0 0.0
        %1250 = vmatpush2.msra.mxu0 0.0
        %1251 = vmatprep.subr.mxu0 0.0
        %1252 = vmatpush2.msra.mxu0 0.0
        %1253 = vmatprep.subr.mxu0 0.0
        %1254 = vmatpush2.msra.mxu0 0.0
        %1255 = vmatprep.subr.mxu0 0.0
        %1256 = vmatpush2.msra.mxu0 0.0
        %1257 = vmatprep.subr.mxu0 0.0
        %1258 = vmatpush2.msra.mxu0 0.0
        %1259 = vmatprep.subr.mxu0 0.0
        %1260 = vmatpush2.msra.mxu0 0.0
        %1261 = vmatprep.subr.mxu0 0.0
        %1262 = vmatpush2.msra.mxu0 0.0
        %1263 = vmatprep.subr.mxu0 0.0
        %1264 = vmatpush2.msra.mxu0 0.0
        %1265 = vmatprep.mubr.f32.mxu0 0.0
        %v1266 = vand.u32 %v884, 4294901760
        %1267 = vmatmul.mubr.f32.gmra.mxu0 %v1266
        %v1268 = vpop.f32.mrf.mxu0
        %v1269 = vadd.f32 %v1192, %v1268
        %v1270 = vpop.f32.mrf.mxu0
        %1271 = vdwg.mxu0
        %1272 = vmatprep.subr.mxu0 0.0
        %1273 = vmatpush1.msra.mxu0 0.0
        %1274 = vmatprep.subr.mxu0 0.0
        %1275 = vmatpush1.msra.mxu0 0.0
        %1276 = vmatprep.subr.mxu0 0.0
        %1277 = vmatpush1.msra.mxu0 0.0
        %1278 = vmatprep.subr.mxu0 0.0
        %1279 = vmatpush1.msra.mxu0 0.0
        %1280 = vmatprep.subr.mxu0 0.0
        %1281 = vmatpush1.msra.mxu0 0.0
        %1282 = vmatprep.subr.mxu0 0.0
        %1283 = vmatpush1.msra.mxu0 0.0
        %1284 = vmatprep.subr.mxu0 0.0
        %1285 = vmatpush1.msra.mxu0 0.0
        %1286 = vmatprep.subr.mxu0 0.0
        %1287 = vmatpush1.msra.mxu0 0.0
        %1288 = vmatprep.subr.mxu0 0.0
        %1289 = vmatpush1.msra.mxu0 0.0
        %1290 = vmatprep.subr.mxu0 0.0
        %1291 = vmatpush1.msra.mxu0 0.0
        %1292 = vmatprep.subr.mxu0 0.0
        %1293 = vmatpush1.msra.mxu0 0.0
        %1294 = vmatprep.subr.mxu0 0.0
        %1295 = vmatpush1.msra.mxu0 0.0
        %1296 = vmatprep.subr.mxu0 0.0
        %1297 = vmatpush1.msra.mxu0 0.0
        %1298 = vmatprep.subr.mxu0 0.0
        %1299 = vmatpush1.msra.mxu0 0.0
        %1300 = vmatprep.subr.mxu0 0.0
        %v1301 = vand.u32 %v881, 4294901760
        %1302 = vmatpush1.msra.mxu0 %v1301
        %1303 = vmatprep.subr.mxu0 0.0
        %v1304 = vand.u32 %v880, 4294901760
        %1305 = vmatpush1.msra.mxu0 %v1304
        %1306 = vmatprep.subr.mxu0 0.0
        %1307 = vmatpush2.msra.mxu0 0.0
        %1308 = vmatprep.subr.mxu0 0.0
        %1309 = vmatpush2.msra.mxu0 0.0
        %1310 = vmatprep.subr.mxu0 0.0
        %1311 = vmatpush2.msra.mxu0 0.0
        %1312 = vmatprep.subr.mxu0 0.0
        %1313 = vmatpush2.msra.mxu0 0.0
        %1314 = vmatprep.subr.mxu0 0.0
        %1315 = vmatpush2.msra.mxu0 0.0
        %1316 = vmatprep.subr.mxu0 0.0
        %1317 = vmatpush2.msra.mxu0 0.0
        %1318 = vmatprep.subr.mxu0 0.0
        %1319 = vmatpush2.msra.mxu0 0.0
        %1320 = vmatprep.subr.mxu0 0.0
        %1321 = vmatpush2.msra.mxu0 0.0
        %1322 = vmatprep.subr.mxu0 0.0
        %1323 = vmatpush2.msra.mxu0 0.0
        %1324 = vmatprep.subr.mxu0 0.0
        %1325 = vmatpush2.msra.mxu0 0.0
        %1326 = vmatprep.subr.mxu0 0.0
        %1327 = vmatpush2.msra.mxu0 0.0
        %1328 = vmatprep.subr.mxu0 0.0
        %1329 = vmatpush2.msra.mxu0 0.0
        %1330 = vmatprep.subr.mxu0 0.0
        %1331 = vmatpush2.msra.mxu0 0.0
        %1332 = vmatprep.subr.mxu0 0.0
        %1333 = vmatpush2.msra.mxu0 0.0
        %1334 = vmatprep.subr.mxu0 0.0
        %1335 = vmatpush2.msra.mxu0 0.0
        %1336 = vmatprep.subr.mxu0 0.0
        %1337 = vmatpush2.msra.mxu0 0.0
        %1338 = vmatprep.mubr.f32.mxu0 0.0
        %v1339 = vand.u32 %v884, 4294901760
        %1340 = vmatmul.mubr.f32.gmra.mxu0 %v1339
        %v1341 = vpop.f32.mrf.mxu0
        %v1342 = vadd.f32 %v1269, %v1341
        %v1343 = vpop.f32.mrf.mxu0
        %1344 = vdwg.mxu0
        %vm1345 = vcmp.eq.s32.totalorder %v873, 0
        %v1346 = vld [vmem:[#allocation3] sm:$0xff]
        %1348 = vset.pattern.permute.xlu0 0
        %1349 = vperm.xlu0 %1348, %v1346
        %v1350 = vpop.permute.xlu0 %1349
        %v1352 = vsel %vm1345, %v1350, %v1342
        %1353 = vrot.lane.b32.xlu0 %v868, 113
        %v1354 = vpop.permute.xlu0 %1353
        %vm1356 = vcmask 7168
        %1357 = vst.msk [vmem:[#allocation3] sm:$0xff] %vm1356, %v1354
        %s1358 = sld [smem:[#allocation5]]
        %v1359 = vstv %s1358
        %v1360 = vmul.f32 %v1359, %v1352
        %v1361 = vadd.f32 %v866, %v1360
        %1362 = vst.msk [vmem:[%s525] sm:$0xff] %vm882, %v1361
        %p1363 = scmp.lt.s32.totalorder %s28, 2
        %s1364 = scalar_select %p1363, %s28, 2
        %p1365 = scmp.lt.s32.totalorder %s29, 0
        %s1366 = scalar_select %p1365, %s29, 0
        %s1367 = sadd.s32 %s1366, %s1364
        %s1368 = smul.addr %s1367, 8
        %s1369 = scalar_lea.vmem %s11, %s1368
        // Predicated region
        $region110: #{tpu_custom_call.1} parent=100 // pred_check
          %p1370 = pneg %p306
        $region111: #{tpu_custom_call.1} parent=100 // pred_check_branch
          %1372 = sbr.rel (%p1370) target = $region113
        $region112: #{tpu_custom_call.1} parent=100 // pred_region
          _
        $region113: #{tpu_custom_call.1} parent=100 // pred_fallthru
          _
      $region101: #{tpu_custom_call.1} parent=5 // pred_fallthru
        _
      %p1373 = scmp.le.s32.totalorder 2, %s19
      // Predicated region
      $region114: #{tpu_custom_call.1} parent=5 // pred_check
        %p1374 = pneg %p1373
      $region115: #{tpu_custom_call.1} parent=5 // pred_check_branch
        %1376 = sbr.rel (%p1374) target = $region117
      $region116: #{tpu_custom_call.1} parent=5 // pred_region
        %s1377 = ssub.s32 %s19, 2
        // Predicated region
        $region118: #{tpu_custom_call.1} parent=116 // pred_check
          %p1378 = pneg %p312
        $region119: #{tpu_custom_call.1} parent=116 // pred_check_branch
          %1380 = sbr.rel (%p1378) target = $region121
        $region120: #{tpu_custom_call.1} parent=116 // pred_region
          %p1381 = scmp.lt.s32.totalorder %s30, 2
          %s1382 = scalar_select %p1381, %s30, 2
          %p1383 = scmp.lt.s32.totalorder %s31, 0
          %s1384 = scalar_select %p1383, %s31, 0
          %s1385 = sadd.s32 %s1384, %s1382
          %s1386 = smul.addr %s1385, 8
          %s1387 = scalar_lea.vmem %s11, %s1386
        $region121: #{tpu_custom_call.1} parent=116 // pred_fallthru
          _
      $region117: #{tpu_custom_call.1} parent=5 // pred_fallthru
        _
    $region6: #{tpu_custom_call.1} parent=1 // loop_footer
      %s23 = sadd.s32 1, %s19
    $region7: #{tpu_custom_call.1} parent=1 // loop_footer_branch
      %18 = sbr.rel target = $region3
    $region8: #{tpu_custom_call.1} parent=1 // loop_exit
      _

</llo_original>
